<compile_context>
chip_gen: v6e
topology: v6e:2x2x1
jax: 0.10.0
libtpu: 0.0.40
codegen_flags: <defaults>
</compile_context>

<pallas_src>
import functools

import numpy as np
import jax
import jax.numpy as jnp
from jax import lax, random
from jax.experimental import pallas as pl
from jax.experimental.pallas import tpu as pltpu


def _round_up(v, m):
    return (v + m - 1) // m * m


# ---------------------------------------------------------------------------
# Fused kernel (one batch sample per grid step):
#   conv1 (9 row-shifted big-K matmuls, BN scale folded) -> +shift -> LReLU ->
#   row mask -> conv2 -> +shift -> LReLU -> 2x2x2 max (row shifts + lane pair)
# ---------------------------------------------------------------------------
def _encoder_block_kernel(x_ref, w1_ref, s1_ref, w2_ref, s2_ref, mask_ref,
                          out_ref, *, wcin, wcout, cout, wm, shifts, halo,
                          rh1, r1, l4, hp, negative_slope):
    x = x_ref[0]                                   # (Rx, Wp*Cin)  bf16
    mask = mask_ref[...]                           # (Rh1, 1)      f32

    # ---- Conv3d #1 (+ folded BN scale): 9 row-shifted matmuls, f32 acc ----
    h1 = None
    for k, sh in enumerate(shifts):
        xs = x[halo + sh:halo + sh + rh1, :]
        wk = w1_ref[k * wcin:(k + 1) * wcin, :]
        t = jnp.dot(xs, wk, preferred_element_type=jnp.float32)
        h1 = t if h1 is None else h1 + t
    h1 = h1 + s1_ref[...]                          # conv bias + BN shift
    h1 = jnp.maximum(h1, negative_slope * h1)      # LeakyReLU(0.2), f32 VPU
    h1 = h1 * mask                                 # zero d/h padding rows
    h1 = h1.astype(w2_ref.dtype)                   # bf16 MXU operand

    # ---- Conv3d #2 (+ folded BN scale) -------------------------------------
    h2 = None
    for k, sh in enumerate(shifts):
        hs = h1[halo + sh:halo + sh + r1, :]
        wk = w2_ref[k * wcout:(k + 1) * wcout, :]
        t = jnp.dot(hs, wk, preferred_element_type=jnp.float32)
        h2 = t if h2 is None else h2 + t
    h2 = h2 + s2_ref[...]
    h2 = jnp.maximum(h2, negative_slope * h2)      # (R1, Wp*Cout) f32

    # ---- MaxPool3d(2): (d,h) neighbourhood via row shifts, w via lane pair -
    m = jnp.maximum(jnp.maximum(h2[0:l4, :], h2[1:l4 + 1, :]),
                    jnp.maximum(h2[hp:l4 + hp, :], h2[hp + 1:l4 + hp + 1, :]))
    out_ref[0] = jnp.maximum(m[:, :wm], m[:, cout:cout + wm])


# ---------------------------------------------------------------------------
# Wrapper: layout prep (packing, padding, BN folding, banded weights) +
# single gridded pallas_call + pure-layout stride-2 gather of the pool result.
# ---------------------------------------------------------------------------
def encoder_block_forward(params, x, *, eps=1e-5, negative_slope=0.2,
                          mxu_dtype=jnp.bfloat16):
    n, c_in, d, h, w = x.shape
    c_out = params["w1"].shape[0]
    assert d % 2 == 0 and h % 2 == 0 and w % 2 == 0

    dp = d + 2
    hp = _round_up(h + 2, 8)            # sublane-aligned d/h tap shifts
    wp = w + 2                          # packed into lanes together with C
    halo = hp + 1                       # max |row shift| of a 3x3x3 tap
    r1 = dp * hp                        # rows per padded sample
    rh1 = r1 + 2 * halo                 # rows of conv1 output held
    rx = r1 + 4 * halo                  # rows of padded input held
    l4 = r1 - hp - 1                    # rows of the pooled (d,h)-max
    wcin, wcout = wp * c_in, wp * c_out
    wm = (wp - 1) * c_out
    do, ho, wo = d // 2, h // 2, w // 2

    shifts = tuple((kd - 1) * hp + (kh - 1)
                   for kd in range(3) for kh in range(3))

    # ---- input: channels-last, (w, c) packed into lanes, halo rows ---------
    x_cl = jnp.transpose(x, (0, 2, 3, 4, 1))                        # NDHWC
    x_pad = jnp.pad(x_cl, ((0, 0), (1, 1), (1, hp - h - 1), (1, 1), (0, 0)))
    x2 = x_pad.reshape(n, r1, wcin)
    x3 = jnp.pad(x2, ((0, 0), (2 * halo, 2 * halo), (0, 0))).astype(mxu_dtype)

    # ---- fold BatchNorm (running stats) into weights / per-channel shifts --
    sc1 = params["gamma1"] * lax.rsqrt(params["var1"] + eps)
    sc2 = params["gamma2"] * lax.rsqrt(params["var2"] + eps)
    shift1 = (params["b1"] - params["mean1"]) * sc1 + params["beta1"]
    shift2 = (params["b2"] - params["mean2"]) * sc2 + params["beta2"]

    # banded (w,c)-packed weights: one (Wp*Cin, Wp*Cout) block per (kd, kh)
    sel = np.zeros((wp, wp, 3), np.float32)
    for pw_out in range(1, w + 1):
        for kw in range(3):
            sel[pw_out + kw - 1, pw_out, kw] = 1.0
    sel = jnp.asarray(sel)

    def banded(weight, scale):
        ci = weight.shape[1]
        wt = jnp.transpose(weight, (2, 3, 4, 1, 0)) * scale   # (kd,kh,kw,ci,co)
        b = jnp.einsum('pqk,abkcd->abpcqd', sel, wt)
        return b.reshape(9 * wp * ci, wp * c_out).astype(mxu_dtype)

    w1b = banded(params["w1"], sc1)
    w2b = banded(params["w2"], sc2)

    col_valid = np.zeros((wp, 1), np.float32)
    col_valid[1:1 + w] = 1.0
    col_valid = jnp.asarray(col_valid)
    s1_full = (col_valid * shift1[None, :]).reshape(1, wcout)
    s2_full = (col_valid * shift2[None, :]).reshape(1, wcout)

    # interior (non-padding) row mask for the intermediate activation
    fr = np.arange(rh1) - halo
    dpi, hpi = fr // hp, fr % hp
    interior = ((fr >= 0) & (fr < r1) &
                (dpi >= 1) & (dpi <= d) & (hpi >= 1) & (hpi <= h))
    mask = jnp.asarray(interior.astype(np.float32)[:, None])        # (Rh1, 1)

    kernel = functools.partial(
        _encoder_block_kernel, wcin=wcin, wcout=wcout, cout=c_out, wm=wm,
        shifts=shifts, halo=halo, rh1=rh1, r1=r1, l4=l4, hp=hp,
        negative_slope=negative_slope)

    flops = 2 * n * 9 * (rh1 * wcin * wcout + r1 * wcout * wcout)
    bytes_accessed = (x3.size * x3.dtype.itemsize
                      + w1b.size * w1b.dtype.itemsize
                      + w2b.size * w2b.dtype.itemsize
                      + (s1_full.size + s2_full.size + mask.size) * 4
                      + n * l4 * wm * 4)

    out_raw = pl.pallas_call(
        kernel,
        out_shape=jax.ShapeDtypeStruct((n, l4, wm), jnp.float32),
        grid=(n,),
        in_specs=[
            pl.BlockSpec((1, rx, wcin), lambda i: (i, 0, 0)),
            pl.BlockSpec((9 * wcin, wcout), lambda i: (0, 0)),
            pl.BlockSpec((1, wcout), lambda i: (0, 0)),
            pl.BlockSpec((9 * wcout, wcout), lambda i: (0, 0)),
            pl.BlockSpec((1, wcout), lambda i: (0, 0)),
            pl.BlockSpec((rh1, 1), lambda i: (0, 0)),
        ],
        out_specs=pl.BlockSpec((1, l4, wm), lambda i: (i, 0, 0)),
        compiler_params=pltpu.CompilerParams(
            dimension_semantics=("parallel",),
            vmem_limit_bytes=32 * 1024 * 1024),
        cost_estimate=pl.CostEstimate(flops=flops, transcendentals=0,
                                      bytes_accessed=bytes_accessed),
    )(x3, w1b, s1_full, w2b, s2_full, mask)

    # stride-2 gather of the pooled values: pure layout, handled by XLA.
    m = out_raw.reshape(n, l4, wp - 1, c_out)
    row_idx = ((1 + 2 * np.arange(do))[:, None] * hp
               + (1 + 2 * np.arange(ho))[None, :]).reshape(-1)
    m = m[:, row_idx]                      # (N, Do*Ho, Wp-1, Cout)
    m = m[:, :, 1:1 + w:2, :]              # (N, Do*Ho, Wo, Cout)
    out = m.reshape(n, do, ho, wo, c_out)
    return jnp.transpose(out, (0, 4, 1, 2, 3))     # back to NCDHW


# ---------------------------------------------------------------------------
# Parameters (xavier_normal_ conv weights, zero bias, BN affine + running stats)
# ---------------------------------------------------------------------------
def init_encoder_block_params(key, in_ch, out_ch):
    ks = random.split(key, 12)

    def xavier(k, shape):
        fan_in = shape[1] * shape[2] * shape[3] * shape[4]
        fan_out = shape[0] * shape[2] * shape[3] * shape[4]
        std = (2.0 / (fan_in + fan_out)) ** 0.5
        return std * random.normal(k, shape, jnp.float32)

    return dict(
        w1=xavier(ks[0], (out_ch, in_ch, 3, 3, 3)),
        b1=jnp.zeros((out_ch,), jnp.float32),
        gamma1=1.0 + 0.1 * random.normal(ks[1], (out_ch,), jnp.float32),
        beta1=0.1 * random.normal(ks[2], (out_ch,), jnp.float32),
        mean1=0.1 * random.normal(ks[3], (out_ch,), jnp.float32),
        var1=jnp.abs(1.0 + 0.1 * random.normal(ks[4], (out_ch,), jnp.float32)),
        w2=xavier(ks[5], (out_ch, out_ch, 3, 3, 3)),
        b2=jnp.zeros((out_ch,), jnp.float32),
        gamma2=1.0 + 0.1 * random.normal(ks[6], (out_ch,), jnp.float32),
        beta2=0.1 * random.normal(ks[7], (out_ch,), jnp.float32),
        mean2=0.1 * random.normal(ks[8], (out_ch,), jnp.float32),
        var2=jnp.abs(1.0 + 0.1 * random.normal(ks[9], (out_ch,), jnp.float32)),
    )


# ---------------------------------------------------------------------------
# Pure-JAX reference (same semantics) for an on-device correctness check.
# ---------------------------------------------------------------------------
def encoder_block_reference(params, x, *, eps=1e-5, negative_slope=0.2):
    def conv_bn_act(y, wgt, b, g, be, rm, rv):
        y = lax.conv_general_dilated(
            y, wgt, window_strides=(1, 1, 1),
            padding=((1, 1), (1, 1), (1, 1)),
            dimension_numbers=("NCDHW", "OIDHW", "NCDHW"),
            precision=lax.Precision.HIGHEST)
        y = y + b[None, :, None, None, None]
        scale = (g * lax.rsqrt(rv + eps))[None, :, None, None, None]
        y = (y - rm[None, :, None, None, None]) * scale + be[None, :, None, None, None]
        return jnp.maximum(y, negative_slope * y)

    y = conv_bn_act(x, params["w1"], params["b1"], params["gamma1"],
                    params["beta1"], params["mean1"], params["var1"])
    y = conv_bn_act(y, params["w2"], params["b2"], params["gamma2"],
                    params["beta2"], params["mean2"], params["var2"])
    return lax.reduce_window(y, -jnp.inf, lax.max,
                             (1, 1, 2, 2, 2), (1, 1, 2, 2, 2), "VALID")


if __name__ == "__main__":
    N, C_IN, C_OUT, D, H, W = 2, 4, 8, 6, 6, 6

    key = random.PRNGKey(0)
    pkey, xkey = random.split(key)
    params = init_encoder_block_params(pkey, C_IN, C_OUT)
    x = random.normal(xkey, (N, C_IN, D, H, W), jnp.float32)

    fwd = jax.jit(encoder_block_forward)
    out = fwd(params, x)
    jax.block_until_ready(out)

    assert out.shape == (N, C_OUT, D // 2, H // 2, W // 2), out.shape

    ref = encoder_block_reference(params, x)
    max_err = float(jnp.max(jnp.abs(out - ref)))
    # bf16 MXU operands with f32 accumulation -> slightly looser tolerance
    # than the previous all-f32 path.
    assert jnp.allclose(out, ref, rtol=2e-2, atol=2e-2), max_err

    print("KERNEL_OK")
</pallas_src>

<mosaic_0001>
module attributes {stable_mosaic.version = 11 : i64} {
  func.func @_encoder_block_kernel(%arg0: i32, %arg1: memref<1x100x32xbf16, #tpu.memory_space<vmem>>, %arg2: memref<288x64xbf16, #tpu.memory_space<vmem>>, %arg3: memref<1x64xf32, #tpu.memory_space<vmem>>, %arg4: memref<576x64xbf16, #tpu.memory_space<vmem>>, %arg5: memref<1x64xf32, #tpu.memory_space<vmem>>, %arg6: memref<82x1xf32, #tpu.memory_space<vmem>>, %arg7: memref<1x55x56xf32, #tpu.memory_space<vmem>>) attributes {dimension_semantics = [#tpu.dimension_semantics<parallel>], iteration_bounds = array<i64: 2>, scalar_prefetch = 0 : i64, scratch_operands = 0 : i64, tpu.core_type = #tpu.core_type<tc>, window_params = [{transform_indices = @transform_0, window_bounds = array<i64: 1, 100, 32>}, {pipeline_mode = #tpu.pipeline_mode<synchronous>, transform_indices = @transform_1, window_bounds = array<i64: 288, 64>}, {pipeline_mode = #tpu.pipeline_mode<synchronous>, transform_indices = @transform_2, window_bounds = array<i64: 1, 64>}, {pipeline_mode = #tpu.pipeline_mode<synchronous>, transform_indices = @transform_3, window_bounds = array<i64: 576, 64>}, {pipeline_mode = #tpu.pipeline_mode<synchronous>, transform_indices = @transform_4, window_bounds = array<i64: 1, 64>}, {pipeline_mode = #tpu.pipeline_mode<synchronous>, transform_indices = @transform_5, window_bounds = array<i64: 82, 1>}, {transform_indices = @transform_6, window_bounds = array<i64: 1, 55, 56>}]} {
    %c0 = arith.constant 0 : index
    %c0_0 = arith.constant 0 : index
    %c0_1 = arith.constant 0 : index
    %0 = vector.load %arg1[%c0, %c0_0, %c0_1] : memref<1x100x32xbf16, #tpu.memory_space<vmem>>, vector<1x100x32xbf16>
    %1 = vector.shape_cast %0 : vector<1x100x32xbf16> to vector<100x32xbf16>
    %c0_2 = arith.constant 0 : index
    %c0_3 = arith.constant 0 : index
    %2 = vector.load %arg6[%c0_2, %c0_3] : memref<82x1xf32, #tpu.memory_space<vmem>>, vector<82x1xf32>
    %3 = vector.extract_strided_slice %1 {offsets = [0, 0], sizes = [82, 32], strides = [1, 1]} : vector<100x32xbf16> to vector<82x32xbf16>
    %c0_4 = arith.constant 0 : index
    %c0_5 = arith.constant 0 : index
    %4 = vector.load %arg2[%c0_4, %c0_5] : memref<288x64xbf16, #tpu.memory_space<vmem>>, vector<32x64xbf16>
    %cst = arith.constant dense<0.000000e+00> : vector<82x64xf32>
    %5 = tpu.matmul %3, %4, %cst {dimension_numbers = #tpu.dot_dimension_numbers<[1], [0], [0], [1], [0, 0, 1, 1], [], []>} : vector<82x32xbf16>, vector<32x64xbf16>, vector<82x64xf32> -> vector<82x64xf32>
    %6 = vector.extract_strided_slice %1 {offsets = [1, 0], sizes = [82, 32], strides = [1, 1]} : vector<100x32xbf16> to vector<82x32xbf16>
    %c32 = arith.constant 32 : index
    %c0_6 = arith.constant 0 : index
    %7 = vector.load %arg2[%c32, %c0_6] : memref<288x64xbf16, #tpu.memory_space<vmem>>, vector<32x64xbf16>
    %cst_7 = arith.constant dense<0.000000e+00> : vector<82x64xf32>
    %8 = tpu.matmul %6, %7, %cst_7 {dimension_numbers = #tpu.dot_dimension_numbers<[1], [0], [0], [1], [0, 0, 1, 1], [], []>} : vector<82x32xbf16>, vector<32x64xbf16>, vector<82x64xf32> -> vector<82x64xf32>
    %9 = arith.addf %5, %8 : vector<82x64xf32>
    %10 = vector.extract_strided_slice %1 {offsets = [2, 0], sizes = [82, 32], strides = [1, 1]} : vector<100x32xbf16> to vector<82x32xbf16>
    %c64 = arith.constant 64 : index
    %c0_8 = arith.constant 0 : index
    %11 = vector.load %arg2[%c64, %c0_8] : memref<288x64xbf16, #tpu.memory_space<vmem>>, vector<32x64xbf16>
    %cst_9 = arith.constant dense<0.000000e+00> : vector<82x64xf32>
    %12 = tpu.matmul %10, %11, %cst_9 {dimension_numbers = #tpu.dot_dimension_numbers<[1], [0], [0], [1], [0, 0, 1, 1], [], []>} : vector<82x32xbf16>, vector<32x64xbf16>, vector<82x64xf32> -> vector<82x64xf32>
    %13 = arith.addf %9, %12 : vector<82x64xf32>
    %14 = vector.extract_strided_slice %1 {offsets = [8, 0], sizes = [82, 32], strides = [1, 1]} : vector<100x32xbf16> to vector<82x32xbf16>
    %c96 = arith.constant 96 : index
    %c0_10 = arith.constant 0 : index
    %15 = vector.load %arg2[%c96, %c0_10] : memref<288x64xbf16, #tpu.memory_space<vmem>>, vector<32x64xbf16>
    %cst_11 = arith.constant dense<0.000000e+00> : vector<82x64xf32>
    %16 = tpu.matmul %14, %15, %cst_11 {dimension_numbers = #tpu.dot_dimension_numbers<[1], [0], [0], [1], [0, 0, 1, 1], [], []>} : vector<82x32xbf16>, vector<32x64xbf16>, vector<82x64xf32> -> vector<82x64xf32>
    %17 = arith.addf %13, %16 : vector<82x64xf32>
    %18 = vector.extract_strided_slice %1 {offsets = [9, 0], sizes = [82, 32], strides = [1, 1]} : vector<100x32xbf16> to vector<82x32xbf16>
    %c128 = arith.constant 128 : index
    %c0_12 = arith.constant 0 : index
    %19 = vector.load %arg2[%c128, %c0_12] : memref<288x64xbf16, #tpu.memory_space<vmem>>, vector<32x64xbf16>
    %cst_13 = arith.constant dense<0.000000e+00> : vector<82x64xf32>
    %20 = tpu.matmul %18, %19, %cst_13 {dimension_numbers = #tpu.dot_dimension_numbers<[1], [0], [0], [1], [0, 0, 1, 1], [], []>} : vector<82x32xbf16>, vector<32x64xbf16>, vector<82x64xf32> -> vector<82x64xf32>
    %21 = arith.addf %17, %20 : vector<82x64xf32>
    %22 = vector.extract_strided_slice %1 {offsets = [10, 0], sizes = [82, 32], strides = [1, 1]} : vector<100x32xbf16> to vector<82x32xbf16>
    %c160 = arith.constant 160 : index
    %c0_14 = arith.constant 0 : index
    %23 = vector.load %arg2[%c160, %c0_14] : memref<288x64xbf16, #tpu.memory_space<vmem>>, vector<32x64xbf16>
    %cst_15 = arith.constant dense<0.000000e+00> : vector<82x64xf32>
    %24 = tpu.matmul %22, %23, %cst_15 {dimension_numbers = #tpu.dot_dimension_numbers<[1], [0], [0], [1], [0, 0, 1, 1], [], []>} : vector<82x32xbf16>, vector<32x64xbf16>, vector<82x64xf32> -> vector<82x64xf32>
    %25 = arith.addf %21, %24 : vector<82x64xf32>
    %26 = vector.extract_strided_slice %1 {offsets = [16, 0], sizes = [82, 32], strides = [1, 1]} : vector<100x32xbf16> to vector<82x32xbf16>
    %c192 = arith.constant 192 : index
    %c0_16 = arith.constant 0 : index
    %27 = vector.load %arg2[%c192, %c0_16] : memref<288x64xbf16, #tpu.memory_space<vmem>>, vector<32x64xbf16>
    %cst_17 = arith.constant dense<0.000000e+00> : vector<82x64xf32>
    %28 = tpu.matmul %26, %27, %cst_17 {dimension_numbers = #tpu.dot_dimension_numbers<[1], [0], [0], [1], [0, 0, 1, 1], [], []>} : vector<82x32xbf16>, vector<32x64xbf16>, vector<82x64xf32> -> vector<82x64xf32>
    %29 = arith.addf %25, %28 : vector<82x64xf32>
    %30 = vector.extract_strided_slice %1 {offsets = [17, 0], sizes = [82, 32], strides = [1, 1]} : vector<100x32xbf16> to vector<82x32xbf16>
    %c224 = arith.constant 224 : index
    %c0_18 = arith.constant 0 : index
    %31 = vector.load %arg2[%c224, %c0_18] : memref<288x64xbf16, #tpu.memory_space<vmem>>, vector<32x64xbf16>
    %cst_19 = arith.constant dense<0.000000e+00> : vector<82x64xf32>
    %32 = tpu.matmul %30, %31, %cst_19 {dimension_numbers = #tpu.dot_dimension_numbers<[1], [0], [0], [1], [0, 0, 1, 1], [], []>} : vector<82x32xbf16>, vector<32x64xbf16>, vector<82x64xf32> -> vector<82x64xf32>
    %33 = arith.addf %29, %32 : vector<82x64xf32>
    %34 = vector.extract_strided_slice %1 {offsets = [18, 0], sizes = [82, 32], strides = [1, 1]} : vector<100x32xbf16> to vector<82x32xbf16>
    %c256 = arith.constant 256 : index
    %c0_20 = arith.constant 0 : index
    %35 = vector.load %arg2[%c256, %c0_20] : memref<288x64xbf16, #tpu.memory_space<vmem>>, vector<32x64xbf16>
    %cst_21 = arith.constant dense<0.000000e+00> : vector<82x64xf32>
    %36 = tpu.matmul %34, %35, %cst_21 {dimension_numbers = #tpu.dot_dimension_numbers<[1], [0], [0], [1], [0, 0, 1, 1], [], []>} : vector<82x32xbf16>, vector<32x64xbf16>, vector<82x64xf32> -> vector<82x64xf32>
    %37 = arith.addf %33, %36 : vector<82x64xf32>
    %c0_22 = arith.constant 0 : index
    %c0_23 = arith.constant 0 : index
    %38 = vector.load %arg3[%c0_22, %c0_23] : memref<1x64xf32, #tpu.memory_space<vmem>>, vector<1x64xf32>
    %39 = vector.broadcast %38 : vector<1x64xf32> to vector<82x64xf32>
    %40 = arith.addf %37, %39 : vector<82x64xf32>
    %cst_24 = arith.constant 2.000000e-01 : f32
    %41 = vector.broadcast %cst_24 : f32 to vector<82x64xf32>
    %42 = arith.mulf %41, %40 : vector<82x64xf32>
    %43 = arith.maximumf %40, %42 : vector<82x64xf32>
    %44 = vector.broadcast %2 : vector<82x1xf32> to vector<82x64xf32>
    %45 = arith.mulf %43, %44 : vector<82x64xf32>
    %46 = arith.truncf %45 : vector<82x64xf32> to vector<82x64xbf16>
    %47 = vector.extract_strided_slice %46 {offsets = [0, 0], sizes = [64, 64], strides = [1, 1]} : vector<82x64xbf16> to vector<64x64xbf16>
    %c0_25 = arith.constant 0 : index
    %c0_26 = arith.constant 0 : index
    %48 = vector.load %arg4[%c0_25, %c0_26] : memref<576x64xbf16, #tpu.memory_space<vmem>>, vector<64x64xbf16>
    %cst_27 = arith.constant dense<0.000000e+00> : vector<64x64xf32>
    %49 = tpu.matmul %47, %48, %cst_27 {dimension_numbers = #tpu.dot_dimension_numbers<[1], [0], [0], [1], [0, 0, 1, 1], [], []>} : vector<64x64xbf16>, vector<64x64xbf16>, vector<64x64xf32> -> vector<64x64xf32>
    %50 = vector.extract_strided_slice %46 {offsets = [1, 0], sizes = [64, 64], strides = [1, 1]} : vector<82x64xbf16> to vector<64x64xbf16>
    %c64_28 = arith.constant 64 : index
    %c0_29 = arith.constant 0 : index
    %51 = vector.load %arg4[%c64_28, %c0_29] : memref<576x64xbf16, #tpu.memory_space<vmem>>, vector<64x64xbf16>
    %cst_30 = arith.constant dense<0.000000e+00> : vector<64x64xf32>
    %52 = tpu.matmul %50, %51, %cst_30 {dimension_numbers = #tpu.dot_dimension_numbers<[1], [0], [0], [1], [0, 0, 1, 1], [], []>} : vector<64x64xbf16>, vector<64x64xbf16>, vector<64x64xf32> -> vector<64x64xf32>
    %53 = arith.addf %49, %52 : vector<64x64xf32>
    %54 = vector.extract_strided_slice %46 {offsets = [2, 0], sizes = [64, 64], strides = [1, 1]} : vector<82x64xbf16> to vector<64x64xbf16>
    %c128_31 = arith.constant 128 : index
    %c0_32 = arith.constant 0 : index
    %55 = vector.load %arg4[%c128_31, %c0_32] : memref<576x64xbf16, #tpu.memory_space<vmem>>, vector<64x64xbf16>
    %cst_33 = arith.constant dense<0.000000e+00> : vector<64x64xf32>
    %56 = tpu.matmul %54, %55, %cst_33 {dimension_numbers = #tpu.dot_dimension_numbers<[1], [0], [0], [1], [0, 0, 1, 1], [], []>} : vector<64x64xbf16>, vector<64x64xbf16>, vector<64x64xf32> -> vector<64x64xf32>
    %57 = arith.addf %53, %56 : vector<64x64xf32>
    %58 = vector.extract_strided_slice %46 {offsets = [8, 0], sizes = [64, 64], strides = [1, 1]} : vector<82x64xbf16> to vector<64x64xbf16>
    %c192_34 = arith.constant 192 : index
    %c0_35 = arith.constant 0 : index
    %59 = vector.load %arg4[%c192_34, %c0_35] : memref<576x64xbf16, #tpu.memory_space<vmem>>, vector<64x64xbf16>
    %cst_36 = arith.constant dense<0.000000e+00> : vector<64x64xf32>
    %60 = tpu.matmul %58, %59, %cst_36 {dimension_numbers = #tpu.dot_dimension_numbers<[1], [0], [0], [1], [0, 0, 1, 1], [], []>} : vector<64x64xbf16>, vector<64x64xbf16>, vector<64x64xf32> -> vector<64x64xf32>
    %61 = arith.addf %57, %60 : vector<64x64xf32>
    %62 = vector.extract_strided_slice %46 {offsets = [9, 0], sizes = [64, 64], strides = [1, 1]} : vector<82x64xbf16> to vector<64x64xbf16>
    %c256_37 = arith.constant 256 : index
    %c0_38 = arith.constant 0 : index
    %63 = vector.load %arg4[%c256_37, %c0_38] : memref<576x64xbf16, #tpu.memory_space<vmem>>, vector<64x64xbf16>
    %cst_39 = arith.constant dense<0.000000e+00> : vector<64x64xf32>
    %64 = tpu.matmul %62, %63, %cst_39 {dimension_numbers = #tpu.dot_dimension_numbers<[1], [0], [0], [1], [0, 0, 1, 1], [], []>} : vector<64x64xbf16>, vector<64x64xbf16>, vector<64x64xf32> -> vector<64x64xf32>
    %65 = arith.addf %61, %64 : vector<64x64xf32>
    %66 = vector.extract_strided_slice %46 {offsets = [10, 0], sizes = [64, 64], strides = [1, 1]} : vector<82x64xbf16> to vector<64x64xbf16>
    %c320 = arith.constant 320 : index
    %c0_40 = arith.constant 0 : index
    %67 = vector.load %arg4[%c320, %c0_40] : memref<576x64xbf16, #tpu.memory_space<vmem>>, vector<64x64xbf16>
    %cst_41 = arith.constant dense<0.000000e+00> : vector<64x64xf32>
    %68 = tpu.matmul %66, %67, %cst_41 {dimension_numbers = #tpu.dot_dimension_numbers<[1], [0], [0], [1], [0, 0, 1, 1], [], []>} : vector<64x64xbf16>, vector<64x64xbf16>, vector<64x64xf32> -> vector<64x64xf32>
    %69 = arith.addf %65, %68 : vector<64x64xf32>
    %70 = vector.extract_strided_slice %46 {offsets = [16, 0], sizes = [64, 64], strides = [1, 1]} : vector<82x64xbf16> to vector<64x64xbf16>
    %c384 = arith.constant 384 : index
    %c0_42 = arith.constant 0 : index
    %71 = vector.load %arg4[%c384, %c0_42] : memref<576x64xbf16, #tpu.memory_space<vmem>>, vector<64x64xbf16>
    %cst_43 = arith.constant dense<0.000000e+00> : vector<64x64xf32>
    %72 = tpu.matmul %70, %71, %cst_43 {dimension_numbers = #tpu.dot_dimension_numbers<[1], [0], [0], [1], [0, 0, 1, 1], [], []>} : vector<64x64xbf16>, vector<64x64xbf16>, vector<64x64xf32> -> vector<64x64xf32>
    %73 = arith.addf %69, %72 : vector<64x64xf32>
    %74 = vector.extract_strided_slice %46 {offsets = [17, 0], sizes = [64, 64], strides = [1, 1]} : vector<82x64xbf16> to vector<64x64xbf16>
    %c448 = arith.constant 448 : index
    %c0_44 = arith.constant 0 : index
    %75 = vector.load %arg4[%c448, %c0_44] : memref<576x64xbf16, #tpu.memory_space<vmem>>, vector<64x64xbf16>
    %cst_45 = arith.constant dense<0.000000e+00> : vector<64x64xf32>
    %76 = tpu.matmul %74, %75, %cst_45 {dimension_numbers = #tpu.dot_dimension_numbers<[1], [0], [0], [1], [0, 0, 1, 1], [], []>} : vector<64x64xbf16>, vector<64x64xbf16>, vector<64x64xf32> -> vector<64x64xf32>
    %77 = arith.addf %73, %76 : vector<64x64xf32>
    %78 = vector.extract_strided_slice %46 {offsets = [18, 0], sizes = [64, 64], strides = [1, 1]} : vector<82x64xbf16> to vector<64x64xbf16>
    %c512 = arith.constant 512 : index
    %c0_46 = arith.constant 0 : index
    %79 = vector.load %arg4[%c512, %c0_46] : memref<576x64xbf16, #tpu.memory_space<vmem>>, vector<64x64xbf16>
    %cst_47 = arith.constant dense<0.000000e+00> : vector<64x64xf32>
    %80 = tpu.matmul %78, %79, %cst_47 {dimension_numbers = #tpu.dot_dimension_numbers<[1], [0], [0], [1], [0, 0, 1, 1], [], []>} : vector<64x64xbf16>, vector<64x64xbf16>, vector<64x64xf32> -> vector<64x64xf32>
    %81 = arith.addf %77, %80 : vector<64x64xf32>
    %c0_48 = arith.constant 0 : index
    %c0_49 = arith.constant 0 : index
    %82 = vector.load %arg5[%c0_48, %c0_49] : memref<1x64xf32, #tpu.memory_space<vmem>>, vector<1x64xf32>
    %83 = vector.broadcast %82 : vector<1x64xf32> to vector<64x64xf32>
    %84 = arith.addf %81, %83 : vector<64x64xf32>
    %cst_50 = arith.constant 2.000000e-01 : f32
    %85 = vector.broadcast %cst_50 : f32 to vector<64x64xf32>
    %86 = arith.mulf %85, %84 : vector<64x64xf32>
    %87 = arith.maximumf %84, %86 : vector<64x64xf32>
    %88 = vector.extract_strided_slice %87 {offsets = [0, 0], sizes = [55, 64], strides = [1, 1]} : vector<64x64xf32> to vector<55x64xf32>
    %89 = vector.extract_strided_slice %87 {offsets = [1, 0], sizes = [55, 64], strides = [1, 1]} : vector<64x64xf32> to vector<55x64xf32>
    %90 = arith.maximumf %88, %89 : vector<55x64xf32>
    %91 = vector.extract_strided_slice %87 {offsets = [8, 0], sizes = [55, 64], strides = [1, 1]} : vector<64x64xf32> to vector<55x64xf32>
    %92 = vector.extract_strided_slice %87 {offsets = [9, 0], sizes = [55, 64], strides = [1, 1]} : vector<64x64xf32> to vector<55x64xf32>
    %93 = arith.maximumf %91, %92 : vector<55x64xf32>
    %94 = arith.maximumf %90, %93 : vector<55x64xf32>
    %95 = vector.extract_strided_slice %94 {offsets = [0, 0], sizes = [55, 56], strides = [1, 1]} : vector<55x64xf32> to vector<55x56xf32>
    %96 = vector.extract_strided_slice %94 {offsets = [0, 8], sizes = [55, 56], strides = [1, 1]} : vector<55x64xf32> to vector<55x56xf32>
    %97 = arith.maximumf %95, %96 : vector<55x56xf32>
    %c0_51 = arith.constant 0 : index
    %c0_52 = arith.constant 0 : index
    %c0_53 = arith.constant 0 : index
    %98 = vector.load %arg7[%c0_51, %c0_52, %c0_53] : memref<1x55x56xf32, #tpu.memory_space<vmem>>, vector<1x55x56xf32>
    %99 = vector.shape_cast %98 : vector<1x55x56xf32> to vector<55x56xf32>
    %100 = vector.shape_cast %97 : vector<55x56xf32> to vector<1x55x56xf32>
    tpu.vector_store %arg7[%c0_51, %c0_52, %c0_53], %100 {strides = array<i32>} : memref<1x55x56xf32, #tpu.memory_space<vmem>>, vector<1x55x56xf32>,
    return
  }
  func.func @transform_0(%arg0: i32) -> (i32, i32, i32) {
    %c0_i32 = arith.constant 0 : i32
    %c0_i32_0 = arith.constant 0 : i32
    %c0_i32_1 = arith.constant 0 : i32
    return %arg0, %c0_i32, %c0_i32_0 : i32, i32, i32
  }
  func.func @transform_1(%arg0: i32) -> (i32, i32) {
    %c0_i32 = arith.constant 0 : i32
    %c0_i32_0 = arith.constant 0 : i32
    %c0_i32_1 = arith.constant 0 : i32
    return %c0_i32, %c0_i32_0 : i32, i32
  }
  func.func @transform_2(%arg0: i32) -> (i32, i32) {
    %c0_i32 = arith.constant 0 : i32
    %c0_i32_0 = arith.constant 0 : i32
    %c0_i32_1 = arith.constant 0 : i32
    return %c0_i32, %c0_i32_0 : i32, i32
  }
  func.func @transform_3(%arg0: i32) -> (i32, i32) {
    %c0_i32 = arith.constant 0 : i32
    %c0_i32_0 = arith.constant 0 : i32
    %c0_i32_1 = arith.constant 0 : i32
    return %c0_i32, %c0_i32_0 : i32, i32
  }
  func.func @transform_4(%arg0: i32) -> (i32, i32) {
    %c0_i32 = arith.constant 0 : i32
    %c0_i32_0 = arith.constant 0 : i32
    %c0_i32_1 = arith.constant 0 : i32
    return %c0_i32, %c0_i32_0 : i32, i32
  }
  func.func @transform_5(%arg0: i32) -> (i32, i32) {
    %c0_i32 = arith.constant 0 : i32
    %c0_i32_0 = arith.constant 0 : i32
    %c0_i32_1 = arith.constant 0 : i32
    return %c0_i32, %c0_i32_0 : i32, i32
  }
  func.func @transform_6(%arg0: i32) -> (i32, i32, i32) {
    %c0_i32 = arith.constant 0 : i32
    %c0_i32_0 = arith.constant 0 : i32
    %c0_i32_1 = arith.constant 0 : i32
    return %arg0, %c0_i32, %c0_i32_0 : i32, i32, i32
  }
}

</mosaic_0001>

<llo_original>
// kernel: encoder_block_forward.1
$region0: #{encoder_block_forward.1}
  #allocation0 [shape = 'u32[]', space=smem, size = 0x4, offset = 0x4, fixed_abs, tag = 'smem constant byte address 0x4 - core index']
  #allocation1 [shape = 'u32[144,128]{1,0:T(1,128)}', space=vmem, size = 0x12000, scoped, tag = 'internal scratch']
  %s0 = inlined_call_operand.vmem [shape: bf16[2,100,32], index: 0, kind: input, shape index: {}]
  %s1 = inlined_call_operand.vmem [shape: bf16[288,64], index: 1, kind: input, shape index: {}]
  %s2 = inlined_call_operand.vmem [shape: f32[1,64], index: 2, kind: input, shape index: {}]
  %s3 = inlined_call_operand.vmem [shape: bf16[576,64], index: 3, kind: input, shape index: {}]
  %s4 = inlined_call_operand.vmem [shape: f32[1,64], index: 4, kind: input, shape index: {}]
  %s5 = inlined_call_operand.vmem [shape: f32[82,1], index: 5, kind: input, shape index: {}]
  %s6 = inlined_call_operand.vmem [shape: f32[2,55,56], index: 6, kind: output, shape index: {}]
  %s7 = sld [smem:[#allocation0]]
  $region57: #{encoder_block_forward.1} parent=0
    _
  %s9 = ssub.s32 1, %s7
  %s10 = scalar_select 0, %s9, %s7
  loop: start=0, step=1, limit=4
  $region2: #{encoder_block_forward.1} parent=0 // loop_pre_header
    _
  $region3: #{encoder_block_forward.1} parent=0 // loop_header
    %s12 = sphi 0, %s16
    %p13 = scmp.ge.s32.totalorder %s12, 4
    %s22 = sphi 0, %s24
    %s25 = sphi 0, %s22
    %s26 = sphi 0, %s25
    %s42 = sphi 0, %s26
    %s46 = sphi 0, %s46
    %s48 = sphi 0, %s46
    %s49 = sphi 0, %s48
    %s63 = sphi 0, %s49
    %s67 = sphi 0, %s67
    %s69 = sphi 0, %s67
    %s70 = sphi 0, %s69
    %s84 = sphi 0, %s70
    %s88 = sphi 0, %s88
    %s90 = sphi 0, %s88
    %s91 = sphi 0, %s90
    %s105 = sphi 0, %s91
    %s109 = sphi 0, %s109
    %s111 = sphi 0, %s109
    %s112 = sphi 0, %s111
    %s126 = sphi 0, %s112
    %s130 = sphi 0, %s130
    %s132 = sphi 0, %s130
    %s133 = sphi 0, %s132
    %s147 = sphi 0, %s133
    %s153 = sphi 0, %s155
    %s156 = sphi 0, %s153
    %s157 = sphi 0, %s156
    %s173 = sphi 0, %s157
  $region4: #{encoder_block_forward.1} parent=0 // loop_header_branch
    %15 = sbr.rel (%p13) target = $region8
  $region5: #{encoder_block_forward.1} parent=0 // loop_body
    %s17 = ssub.s32 %s12, 1
    %s18 = ssub.s32 %s12, 2
    %s19 = sadd.s32 %s12, 1
    %s20 = ssub.s32 %s12, %s19
    %p21 = scmp.eq.s32.totalorder %s20, 0
    %s23 = sadd.s32 %s22, 1
    %s24 = scalar_select %p21, %s22, %s23
    %p27 = pneg %p21
    %p28 = scmp.eq.s32.totalorder %s12, 1
    %p29 = por %p27, %p28
    %p30 = scmp.ne.s32.totalorder %s22, %s25
    %p31 = scmp.eq.s32.totalorder %s12, 0
    %p32 = por %p30, %p31
    %p33 = scmp.ne.s32.totalorder %s22, %s25
    %p34 = scmp.eq.s32.totalorder %s17, 1
    %p35 = por %p33, %p34
    %p36 = scmp.ne.s32.totalorder %s25, %s26
    %p37 = scmp.eq.s32.totalorder %s17, 0
    %p38 = por %p36, %p37
    %p39 = scmp.ne.s32.totalorder %s25, %s26
    %p40 = scmp.eq.s32.totalorder %s18, 1
    %p41 = por %p39, %p40
    %p43 = scmp.ne.s32.totalorder %s26, %s42
    %p44 = scmp.eq.s32.totalorder %s18, 0
    %p45 = por %p43, %p44
    %s47 = sadd.s32 %s46, 1
    %p50 = scmp.eq.s32.totalorder %s12, 1
    %p51 = scmp.ne.s32.totalorder %s46, %s48
    %p52 = scmp.eq.s32.totalorder %s12, 0
    %p53 = por %p51, %p52
    %p54 = scmp.ne.s32.totalorder %s46, %s48
    %p55 = scmp.eq.s32.totalorder %s17, 1
    %p56 = por %p54, %p55
    %p57 = scmp.ne.s32.totalorder %s48, %s49
    %p58 = scmp.eq.s32.totalorder %s17, 0
    %p59 = por %p57, %p58
    %p60 = scmp.ne.s32.totalorder %s48, %s49
    %p61 = scmp.eq.s32.totalorder %s18, 1
    %p62 = por %p60, %p61
    %p64 = scmp.ne.s32.totalorder %s49, %s63
    %p65 = scmp.eq.s32.totalorder %s18, 0
    %p66 = por %p64, %p65
    %s68 = sadd.s32 %s67, 1
    %p71 = scmp.eq.s32.totalorder %s12, 1
    %p72 = scmp.ne.s32.totalorder %s67, %s69
    %p73 = scmp.eq.s32.totalorder %s12, 0
    %p74 = por %p72, %p73
    %p75 = scmp.ne.s32.totalorder %s67, %s69
    %p76 = scmp.eq.s32.totalorder %s17, 1
    %p77 = por %p75, %p76
    %p78 = scmp.ne.s32.totalorder %s69, %s70
    %p79 = scmp.eq.s32.totalorder %s17, 0
    %p80 = por %p78, %p79
    %p81 = scmp.ne.s32.totalorder %s69, %s70
    %p82 = scmp.eq.s32.totalorder %s18, 1
    %p83 = por %p81, %p82
    %p85 = scmp.ne.s32.totalorder %s70, %s84
    %p86 = scmp.eq.s32.totalorder %s18, 0
    %p87 = por %p85, %p86
    %s89 = sadd.s32 %s88, 1
    %p92 = scmp.eq.s32.totalorder %s12, 1
    %p93 = scmp.ne.s32.totalorder %s88, %s90
    %p94 = scmp.eq.s32.totalorder %s12, 0
    %p95 = por %p93, %p94
    %p96 = scmp.ne.s32.totalorder %s88, %s90
    %p97 = scmp.eq.s32.totalorder %s17, 1
    %p98 = por %p96, %p97
    %p99 = scmp.ne.s32.totalorder %s90, %s91
    %p100 = scmp.eq.s32.totalorder %s17, 0
    %p101 = por %p99, %p100
    %p102 = scmp.ne.s32.totalorder %s90, %s91
    %p103 = scmp.eq.s32.totalorder %s18, 1
    %p104 = por %p102, %p103
    %p106 = scmp.ne.s32.totalorder %s91, %s105
    %p107 = scmp.eq.s32.totalorder %s18, 0
    %p108 = por %p106, %p107
    %s110 = sadd.s32 %s109, 1
    %p113 = scmp.eq.s32.totalorder %s12, 1
    %p114 = scmp.ne.s32.totalorder %s109, %s111
    %p115 = scmp.eq.s32.totalorder %s12, 0
    %p116 = por %p114, %p115
    %p117 = scmp.ne.s32.totalorder %s109, %s111
    %p118 = scmp.eq.s32.totalorder %s17, 1
    %p119 = por %p117, %p118
    %p120 = scmp.ne.s32.totalorder %s111, %s112
    %p121 = scmp.eq.s32.totalorder %s17, 0
    %p122 = por %p120, %p121
    %p123 = scmp.ne.s32.totalorder %s111, %s112
    %p124 = scmp.eq.s32.totalorder %s18, 1
    %p125 = por %p123, %p124
    %p127 = scmp.ne.s32.totalorder %s112, %s126
    %p128 = scmp.eq.s32.totalorder %s18, 0
    %p129 = por %p127, %p128
    %s131 = sadd.s32 %s130, 1
    %p134 = scmp.eq.s32.totalorder %s12, 1
    %p135 = scmp.ne.s32.totalorder %s130, %s132
    %p136 = scmp.eq.s32.totalorder %s12, 0
    %p137 = por %p135, %p136
    %p138 = scmp.ne.s32.totalorder %s130, %s132
    %p139 = scmp.eq.s32.totalorder %s17, 1
    %p140 = por %p138, %p139
    %p141 = scmp.ne.s32.totalorder %s132, %s133
    %p142 = scmp.eq.s32.totalorder %s17, 0
    %p143 = por %p141, %p142
    %p144 = scmp.ne.s32.totalorder %s132, %s133
    %p145 = scmp.eq.s32.totalorder %s18, 1
    %p146 = por %p144, %p145
    %p148 = scmp.ne.s32.totalorder %s133, %s147
    %p149 = scmp.eq.s32.totalorder %s18, 0
    %p150 = por %p148, %p149
    %s151 = ssub.s32 %s12, %s19
    %p152 = scmp.eq.s32.totalorder %s151, 0
    %s154 = sadd.s32 %s153, 1
    %s155 = scalar_select %p152, %s153, %s154
    %p158 = pneg %p152
    %p159 = scmp.eq.s32.totalorder %s12, 1
    %p160 = por %p158, %p159
    %p161 = scmp.ne.s32.totalorder %s153, %s156
    %p162 = scmp.eq.s32.totalorder %s12, 0
    %p163 = por %p161, %p162
    %p164 = scmp.ne.s32.totalorder %s153, %s156
    %p165 = scmp.eq.s32.totalorder %s17, 1
    %p166 = por %p164, %p165
    %p167 = scmp.ne.s32.totalorder %s156, %s157
    %p168 = scmp.eq.s32.totalorder %s17, 0
    %p169 = por %p167, %p168
    %p170 = scmp.ne.s32.totalorder %s156, %s157
    %p171 = scmp.eq.s32.totalorder %s18, 1
    %p172 = por %p170, %p171
    %p174 = scmp.ne.s32.totalorder %s157, %s173
    %p175 = scmp.eq.s32.totalorder %s18, 0
    %p176 = por %p174, %p175
    %p177 = scmp.le.s32.totalorder 1, %s12
    %p178 = scmp.lt.s32.totalorder %s12, 3
    %p179 = pnand %p177, %p178
    %p180 = pneg %p179
    // Predicated region
    $region9: #{encoder_block_forward.1} parent=5 // pred_check
      _
    $region10: #{encoder_block_forward.1} parent=5 // pred_check_branch
      %182 = sbr.rel (%p179) target = $region12
    $region11: #{encoder_block_forward.1} parent=5 // pred_region
      %s183 = ssub.s32 %s12, 1
      // Predicated region
      $region13: #{encoder_block_forward.1} parent=11 // pred_check
        %p184 = pneg %p59
      $region14: #{encoder_block_forward.1} parent=11 // pred_check_branch
        %186 = sbr.rel (%p184) target = $region16
      $region15: #{encoder_block_forward.1} parent=11 // pred_region
        _
      $region16: #{encoder_block_forward.1} parent=11 // pred_fallthru
        _
      // Predicated region
      $region17: #{encoder_block_forward.1} parent=11 // pred_check
        %p187 = pneg %p80
      $region18: #{encoder_block_forward.1} parent=11 // pred_check_branch
        %189 = sbr.rel (%p187) target = $region20
      $region19: #{encoder_block_forward.1} parent=11 // pred_region
        _
      $region20: #{encoder_block_forward.1} parent=11 // pred_fallthru
        _
      // Predicated region
      $region21: #{encoder_block_forward.1} parent=11 // pred_check
        %p190 = pneg %p101
      $region22: #{encoder_block_forward.1} parent=11 // pred_check_branch
        %192 = sbr.rel (%p190) target = $region24
      $region23: #{encoder_block_forward.1} parent=11 // pred_region
        _
      $region24: #{encoder_block_forward.1} parent=11 // pred_fallthru
        _
      // Predicated region
      $region25: #{encoder_block_forward.1} parent=11 // pred_check
        %p193 = pneg %p122
      $region26: #{encoder_block_forward.1} parent=11 // pred_check_branch
        %195 = sbr.rel (%p193) target = $region28
      $region27: #{encoder_block_forward.1} parent=11 // pred_region
        _
      $region28: #{encoder_block_forward.1} parent=11 // pred_fallthru
        _
      // Predicated region
      $region29: #{encoder_block_forward.1} parent=11 // pred_check
        %p196 = pneg %p143
      $region30: #{encoder_block_forward.1} parent=11 // pred_check_branch
        %198 = sbr.rel (%p196) target = $region32
      $region31: #{encoder_block_forward.1} parent=11 // pred_region
        _
      $region32: #{encoder_block_forward.1} parent=11 // pred_fallthru
        _
    $region12: #{encoder_block_forward.1} parent=5 // pred_fallthru
      _
    %p199 = scmp.lt.s32.totalorder %s12, 2
    // Predicated region
    $region33: #{encoder_block_forward.1} parent=5 // pred_check
      %p200 = pneg %p199
    $region34: #{encoder_block_forward.1} parent=5 // pred_check_branch
      %202 = sbr.rel (%p200) target = $region36
    $region35: #{encoder_block_forward.1} parent=5 // pred_region
      // Predicated region
      $region37: #{encoder_block_forward.1} parent=35 // pred_check
        %p203 = pneg %p32
      $region38: #{encoder_block_forward.1} parent=35 // pred_check_branch
        %205 = sbr.rel (%p203) target = $region40
      $region39: #{encoder_block_forward.1} parent=35 // pred_region
        %p206 = scmp.lt.s32.totalorder %s12, 1
        %s207 = scalar_select %p206, %s12, 1
        %s208 = smul.addr %s207, 13
        %s209 = smul.addr %s208, 4
        %s210 = scalar_lea.vmem %s0, %s209
      $region40: #{encoder_block_forward.1} parent=35 // pred_fallthru
        _
    $region36: #{encoder_block_forward.1} parent=5 // pred_fallthru
      _
    %p211 = scmp.le.s32.totalorder 1, %s12
    %p212 = scmp.lt.s32.totalorder %s12, 3
    %p213 = pnand %p211, %p212
    %p214 = pneg %p213
    // Predicated region
    $region41: #{encoder_block_forward.1} parent=5 // pred_check
      _
    $region42: #{encoder_block_forward.1} parent=5 // pred_check_branch
      %216 = sbr.rel (%p213) target = $region44
    $region43: #{encoder_block_forward.1} parent=5 // pred_region
      %s217 = ssub.s32 %s12, 1
      %p218 = scmp.lt.s32.totalorder %s17, 1
      %s219 = scalar_select %p218, %s17, 1
      %s220 = smul.addr %s219, 13
      %s221 = smul.addr %s220, 4
      %s222 = scalar_lea.vmem %s0, %s221
      %p223 = pneg %p38
      %p224 = pneg %p35
      %p225 = pneg %p59
      %p226 = pneg %p56
      %p227 = pneg %p80
      %p228 = pneg %p77
      %p229 = pneg %p101
      %p230 = pneg %p98
      %p231 = pneg %p122
      %p232 = pneg %p119
      %p233 = pneg %p143
      %p234 = pneg %p140
      %p235 = pneg %p169
      %p236 = pneg %p166
      %p237 = scmp.lt.s32.totalorder %s17, 1
      %s238 = scalar_select %p237, %s17, 1
      %s239 = smul.addr %s238, 7
      %s240 = smul.addr %s239, 8
      %s241 = scalar_lea.vmem %s6, %s240
      %p242 = scmp.lt.s32.totalorder %s17, 1
      %s243 = scalar_select %p242, %s17, 1
      %s244 = smul.addr %s243, 13
      %s245 = smul.addr %s244, 4
      %s246 = scalar_lea.vmem %s0, %s245
      %p247 = scmp.lt.s32.totalorder %s17, 1
      %s248 = scalar_select %p247, %s17, 1
      %s249 = smul.addr %s248, 7
      %s250 = smul.addr %s249, 8
      %s251 = scalar_lea.vmem %s6, %s250
      %v253 = vld [vmem:[%s246] sm:$0xf]
      %v254 = vld [vmem:[%s246 + $0x4] sm:$0xf]
      %v255 = vld [vmem:[%s246 + $0x8] sm:$0xf]
      %v256 = vld [vmem:[%s246 + $0xc] sm:$0xf]
      %v257 = vld [vmem:[%s246 + $0x10] sm:$0xf]
      %v258 = vld [vmem:[%s246 + $0x14] sm:$0xf]
      %v259 = vld [vmem:[%s246 + $0x18] sm:$0xf]
      %v260 = vld [vmem:[%s246 + $0x1c] sm:$0xf]
      %v261 = vld [vmem:[%s246 + $0x20] sm:$0xf]
      %v262 = vld [vmem:[%s246 + $0x24] sm:$0xf]
      %v263 = vld [vmem:[%s246 + $0x28] sm:$0xf]
      %v264 = vld [vmem:[%s246 + $0x2c] sm:$0xf]
      %v265 = vld [vmem:[%s246 + $0x30] sm:$0x3]
      %v266 = vld [vmem:[%s5] sm:$0xff]
      %v267 = vld [vmem:[%s5 + $0x8] sm:$0xff]
      %v268 = vld [vmem:[%s5 + $0x10] sm:$0xff]
      %v269 = vld [vmem:[%s5 + $0x18] sm:$0xff]
      %v270 = vld [vmem:[%s5 + $0x20] sm:$0xff]
      %v271 = vld [vmem:[%s5 + $0x28] sm:$0xff]
      %v272 = vld [vmem:[%s5 + $0x30] sm:$0xff]
      %v273 = vld [vmem:[%s5 + $0x38] sm:$0xff]
      %v274 = vld [vmem:[%s5 + $0x40] sm:$0xff]
      %v275 = vld [vmem:[%s5 + $0x48] sm:$0xff]
      %v276 = vld [vmem:[%s5 + $0x50] sm:$0x3]
      %v277 = vld [vmem:[%s1] sm:$0xf]
      %v278 = vld [vmem:[%s1 + $0x4] sm:$0xf]
      %v279 = vld [vmem:[%s1 + $0x8] sm:$0xf]
      %v280 = vld [vmem:[%s1 + $0xc] sm:$0xf]
      %v281 = vld [vmem:[%s1 + $0x10] sm:$0xf]
      %v282 = vld [vmem:[%s1 + $0x14] sm:$0xf]
      %v283 = vld [vmem:[%s1 + $0x18] sm:$0xf]
      %v284 = vld [vmem:[%s1 + $0x1c] sm:$0xf]
      %v296 = vunpack.c.l.b16 %v253
      %v297 = vunpack.c.l.b16 %v254
      %v298 = vunpack.c.l.b16 %v255
      %v299 = vunpack.c.l.b16 %v256
      %v300 = vunpack.c.l.b16 %v257
      %v301 = vunpack.c.l.b16 %v258
      %v302 = vunpack.c.l.b16 %v259
      %v303 = vunpack.c.l.b16 %v260
      %v304 = vunpack.c.l.b16 %v261
      %v305 = vunpack.c.l.b16 %v262
      %v306 = vunpack.c.l.b16 %v263
      %v307 = vpack.c.b16 %v297, %v296
      %v308 = vpack.c.b16 %v299, %v298
      %v309 = vpack.c.b16 %v301, %v300
      %v310 = vpack.c.b16 %v303, %v302
      %v311 = vpack.c.b16 %v305, %v304
      %v312 = vpack.c.b16 %v306, %v306
      %vm313 = vsmask.f32 7424
      %v315 = vshrl.u32 %v307, 16
      %v317 = vshll.u32 %v307, 16
      %v319 = vrot.slane %v317, 1
      %v320 = vor.u32 %v315, %v319
      %v322 = vshll.u32 %v308, 16
      %v324 = vrot.slane %v322, 1
      %v325 = vsel %vm313, %v320, %v324
      %v326 = vshrl.u32 %v308, 16
      %v328 = vor.u32 %v326, %v324
      %v330 = vshll.u32 %v309, 16
      %v332 = vrot.slane %v330, 1
      %v333 = vsel %vm313, %v328, %v332
      %v334 = vshrl.u32 %v309, 16
      %v336 = vor.u32 %v334, %v332
      %v338 = vshll.u32 %v310, 16
      %v340 = vrot.slane %v338, 1
      %v341 = vsel %vm313, %v336, %v340
      %v342 = vshrl.u32 %v310, 16
      %v344 = vor.u32 %v342, %v340
      %v346 = vshll.u32 %v311, 16
      %v348 = vrot.slane %v346, 1
      %v349 = vsel %vm313, %v344, %v348
      %v350 = vshrl.u32 %v311, 16
      %v352 = vor.u32 %v350, %v348
      %v354 = vshll.u32 %v312, 16
      %v356 = vrot.slane %v354, 1
      %v357 = vsel %vm313, %v352, %v356
      %v358 = vshrl.u32 %v312, 16
      %v360 = vor.u32 %v358, %v356
      %v365 = vunpack.c.l.b16 %v281
      %v366 = vunpack.c.l.b16 %v282
      %v367 = vunpack.c.l.b16 %v283
      %v368 = vunpack.c.l.b16 %v284
      %v369 = vpack.c.b16 %v366, %v365
      %v370 = vpack.c.b16 %v368, %v367
      %vm373 = vcmask 261120
      %v375 = vsel %vm373, %v325, 0
      %v378 = vsel %vm373, %v333, 0
      %v381 = vsel %vm373, %v341, 0
      %v384 = vsel %vm373, %v349, 0
      %v387 = vsel %vm373, %v357, 0
      %v390 = vsel %vm373, %v360, 0
      %392 = vmatprep.subr.bf16.mxu0 0
      %393 = vmatpush1.bf16.msra.mxu0 0
      %394 = vmatprep.subr.bf16.mxu0 0
      %395 = vmatpush1.bf16.msra.mxu0 0
      %396 = vmatprep.subr.bf16.mxu0 0
      %397 = vmatpush1.bf16.msra.mxu0 0
      %398 = vmatprep.subr.bf16.mxu0 0
      %399 = vmatpush1.bf16.msra.mxu0 0
      %400 = vmatprep.subr.bf16.mxu0 0
      %401 = vmatpush1.bf16.msra.mxu0 0
      %402 = vmatprep.subr.bf16.mxu0 0
      %403 = vmatpush1.bf16.msra.mxu0 0
      %404 = vmatprep.subr.bf16.mxu0 0
      %405 = vmatpush1.bf16.msra.mxu0 %v370
      %406 = vmatprep.subr.bf16.mxu0 0
      %407 = vmatpush1.bf16.msra.mxu0 %v369
      %408 = vmatprep.subr.bf16.mxu0 0
      %409 = vmatpush2.bf16.msra.mxu0 0
      %410 = vmatprep.subr.bf16.mxu0 0
      %411 = vmatpush2.bf16.msra.mxu0 0
      %412 = vmatprep.subr.bf16.mxu0 0
      %413 = vmatpush2.bf16.msra.mxu0 0
      %414 = vmatprep.subr.bf16.mxu0 0
      %415 = vmatpush2.bf16.msra.mxu0 0
      %416 = vmatprep.subr.bf16.mxu0 0
      %417 = vmatpush2.bf16.msra.mxu0 0
      %418 = vmatprep.subr.bf16.mxu0 0
      %419 = vmatpush2.bf16.msra.mxu0 0
      %420 = vmatprep.subr.bf16.mxu0 0
      %421 = vmatpush2.bf16.msra.mxu0 0
      %422 = vmatprep.subr.bf16.mxu0 0
      %423 = vmatpush2.bf16.msra.mxu0 0
      %424 = vmatprep.mubr.bf16.mxu0 0
      %425 = vmatmul.mubr.bf16.gmra.mxu0 %v375
      %v426 = vpop.f32.mrf.mxu0
      %v427 = vadd.f32 0.0, %v426
      %v428 = vpop.f32.mrf.mxu0
      %v429 = vpop.f32.mrf.mxu0
      %v430 = vadd.f32 0.0, %v429
      %v431 = vpop.f32.mrf.mxu0
      %432 = vmatprep.mubr.bf16.mxu0 0
      %433 = vmatmul.mubr.bf16.gmra.mxu0 %v378
      %v434 = vpop.f32.mrf.mxu0
      %v435 = vadd.f32 0.0, %v434
      %v436 = vpop.f32.mrf.mxu0
      %v437 = vpop.f32.mrf.mxu0
      %v438 = vadd.f32 0.0, %v437
      %v439 = vpop.f32.mrf.mxu0
      %440 = vmatprep.mubr.bf16.mxu0 0
      %441 = vmatmul.mubr.bf16.gmra.mxu0 %v381
      %v442 = vpop.f32.mrf.mxu0
      %v443 = vadd.f32 0.0, %v442
      %v444 = vpop.f32.mrf.mxu0
      %v445 = vpop.f32.mrf.mxu0
      %v446 = vadd.f32 0.0, %v445
      %v447 = vpop.f32.mrf.mxu0
      %448 = vmatprep.mubr.bf16.mxu0 0
      %449 = vmatmul.mubr.bf16.gmra.mxu0 %v384
      %v450 = vpop.f32.mrf.mxu0
      %v451 = vadd.f32 0.0, %v450
      %v452 = vpop.f32.mrf.mxu0
      %v453 = vpop.f32.mrf.mxu0
      %v454 = vadd.f32 0.0, %v453
      %v455 = vpop.f32.mrf.mxu0
      %456 = vmatprep.mubr.bf16.mxu0 0
      %457 = vmatmul.mubr.bf16.gmra.mxu0 %v387
      %v458 = vpop.f32.mrf.mxu0
      %v459 = vadd.f32 0.0, %v458
      %v460 = vpop.f32.mrf.mxu0
      %v461 = vpop.f32.mrf.mxu0
      %v462 = vadd.f32 0.0, %v461
      %v463 = vpop.f32.mrf.mxu0
      %464 = vmatprep.mubr.bf16.mxu0 0
      %465 = vmatmul.mubr.bf16.gmra.mxu0 %v390
      %v466 = vpop.f32.mrf.mxu0
      %v467 = vadd.f32 0.0, %v466
      %v468 = vpop.f32.mrf.mxu0
      %v469 = vpop.f32.mrf.mxu0
      %v470 = vpop.f32.mrf.mxu0
      %471 = vdwg.mxu0
      %v476 = vunpack.c.l.b16 %v277
      %v477 = vunpack.c.l.b16 %v278
      %v478 = vunpack.c.l.b16 %v279
      %v479 = vunpack.c.l.b16 %v280
      %v480 = vpack.c.b16 %v477, %v476
      %v481 = vpack.c.b16 %v479, %v478
      %v484 = vsel %vm373, %v307, 0
      %v486 = vsel %vm373, %v308, 0
      %v488 = vsel %vm373, %v309, 0
      %v490 = vsel %vm373, %v310, 0
      %v492 = vsel %vm373, %v311, 0
      %v494 = vsel %vm373, %v312, 0
      %496 = vmatprep.subr.bf16.mxu0 0
      %497 = vmatpush1.bf16.msra.mxu0 0
      %498 = vmatprep.subr.bf16.mxu0 0
      %499 = vmatpush1.bf16.msra.mxu0 0
      %500 = vmatprep.subr.bf16.mxu0 0
      %501 = vmatpush1.bf16.msra.mxu0 0
      %502 = vmatprep.subr.bf16.mxu0 0
      %503 = vmatpush1.bf16.msra.mxu0 0
      %504 = vmatprep.subr.bf16.mxu0 0
      %505 = vmatpush1.bf16.msra.mxu0 0
      %506 = vmatprep.subr.bf16.mxu0 0
      %507 = vmatpush1.bf16.msra.mxu0 0
      %508 = vmatprep.subr.bf16.mxu0 0
      %509 = vmatpush1.bf16.msra.mxu0 %v481
      %510 = vmatprep.subr.bf16.mxu0 0
      %511 = vmatpush1.bf16.msra.mxu0 %v480
      %512 = vmatprep.subr.bf16.mxu0 0
      %513 = vmatpush2.bf16.msra.mxu0 0
      %514 = vmatprep.subr.bf16.mxu0 0
      %515 = vmatpush2.bf16.msra.mxu0 0
      %516 = vmatprep.subr.bf16.mxu0 0
      %517 = vmatpush2.bf16.msra.mxu0 0
      %518 = vmatprep.subr.bf16.mxu0 0
      %519 = vmatpush2.bf16.msra.mxu0 0
      %520 = vmatprep.subr.bf16.mxu0 0
      %521 = vmatpush2.bf16.msra.mxu0 0
      %522 = vmatprep.subr.bf16.mxu0 0
      %523 = vmatpush2.bf16.msra.mxu0 0
      %524 = vmatprep.subr.bf16.mxu0 0
      %525 = vmatpush2.bf16.msra.mxu0 0
      %526 = vmatprep.subr.bf16.mxu0 0
      %527 = vmatpush2.bf16.msra.mxu0 0
      %528 = vmatprep.mubr.bf16.mxu0 0
      %529 = vmatmul.mubr.bf16.gmra.mxu0 %v484
      %v530 = vpop.f32.mrf.mxu0
      %v531 = vadd.f32 %v427, %v530
      %v532 = vpop.f32.mrf.mxu0
      %v533 = vpop.f32.mrf.mxu0
      %v534 = vadd.f32 %v430, %v533
      %v535 = vpop.f32.mrf.mxu0
      %536 = vmatprep.mubr.bf16.mxu0 0
      %537 = vmatmul.mubr.bf16.gmra.mxu0 %v486
      %v538 = vpop.f32.mrf.mxu0
      %v539 = vadd.f32 %v435, %v538
      %v540 = vpop.f32.mrf.mxu0
      %v541 = vpop.f32.mrf.mxu0
      %v542 = vadd.f32 %v438, %v541
      %v543 = vpop.f32.mrf.mxu0
      %544 = vmatprep.mubr.bf16.mxu0 0
      %545 = vmatmul.mubr.bf16.gmra.mxu0 %v488
      %v546 = vpop.f32.mrf.mxu0
      %v547 = vadd.f32 %v443, %v546
      %v548 = vpop.f32.mrf.mxu0
      %v549 = vpop.f32.mrf.mxu0
      %v550 = vadd.f32 %v446, %v549
      %v551 = vpop.f32.mrf.mxu0
      %552 = vmatprep.mubr.bf16.mxu0 0
      %553 = vmatmul.mubr.bf16.gmra.mxu0 %v490
      %v554 = vpop.f32.mrf.mxu0
      %v555 = vadd.f32 %v451, %v554
      %v556 = vpop.f32.mrf.mxu0
      %v557 = vpop.f32.mrf.mxu0
      %v558 = vadd.f32 %v454, %v557
      %v559 = vpop.f32.mrf.mxu0
      %560 = vmatprep.mubr.bf16.mxu0 0
      %561 = vmatmul.mubr.bf16.gmra.mxu0 %v492
      %v562 = vpop.f32.mrf.mxu0
      %v563 = vadd.f32 %v459, %v562
      %v564 = vpop.f32.mrf.mxu0
      %v565 = vpop.f32.mrf.mxu0
      %v566 = vadd.f32 %v462, %v565
      %v567 = vpop.f32.mrf.mxu0
      %568 = vmatprep.mubr.bf16.mxu0 0
      %569 = vmatmul.mubr.bf16.gmra.mxu0 %v494
      %v570 = vpop.f32.mrf.mxu0
      %v571 = vadd.f32 %v467, %v570
      %v572 = vpop.f32.mrf.mxu0
      %v573 = vpop.f32.mrf.mxu0
      %v574 = vpop.f32.mrf.mxu0
      %575 = vdwg.mxu0
      %v576 = vld [vmem:[%s1 + $0x20] sm:$0xf]
      %v577 = vld [vmem:[%s1 + $0x24] sm:$0xf]
      %v578 = vld [vmem:[%s1 + $0x28] sm:$0xf]
      %v579 = vld [vmem:[%s1 + $0x2c] sm:$0xf]
      %vm580 = vcmask 1046528
      %v581 = vrot.slane %v307, 1
      %v582 = vrot.slane %v308, 1
      %v583 = vsel %vm580, %v581, %v582
      %v584 = vrot.slane %v309, 1
      %v585 = vsel %vm580, %v582, %v584
      %v586 = vrot.slane %v310, 1
      %v587 = vsel %vm580, %v584, %v586
      %v588 = vrot.slane %v311, 1
      %v589 = vsel %vm580, %v586, %v588
      %v590 = vrot.slane %v312, 1
      %v591 = vsel %vm580, %v588, %v590
      %v596 = vunpack.c.l.b16 %v576
      %v597 = vunpack.c.l.b16 %v577
      %v598 = vunpack.c.l.b16 %v578
      %v599 = vunpack.c.l.b16 %v579
      %v600 = vpack.c.b16 %v597, %v596
      %v601 = vpack.c.b16 %v599, %v598
      %v605 = vsel %vm373, %v583, 0
      %v608 = vsel %vm373, %v585, 0
      %v611 = vsel %vm373, %v587, 0
      %v614 = vsel %vm373, %v589, 0
      %v617 = vsel %vm373, %v591, 0
      %v620 = vsel %vm373, %v590, 0
      %622 = vmatprep.subr.bf16.mxu0 0
      %623 = vmatpush1.bf16.msra.mxu0 0
      %624 = vmatprep.subr.bf16.mxu0 0
      %625 = vmatpush1.bf16.msra.mxu0 0
      %626 = vmatprep.subr.bf16.mxu0 0
      %627 = vmatpush1.bf16.msra.mxu0 0
      %628 = vmatprep.subr.bf16.mxu0 0
      %629 = vmatpush1.bf16.msra.mxu0 0
      %630 = vmatprep.subr.bf16.mxu0 0
      %631 = vmatpush1.bf16.msra.mxu0 0
      %632 = vmatprep.subr.bf16.mxu0 0
      %633 = vmatpush1.bf16.msra.mxu0 0
      %634 = vmatprep.subr.bf16.mxu0 0
      %635 = vmatpush1.bf16.msra.mxu0 %v601
      %636 = vmatprep.subr.bf16.mxu0 0
      %637 = vmatpush1.bf16.msra.mxu0 %v600
      %638 = vmatprep.subr.bf16.mxu0 0
      %639 = vmatpush2.bf16.msra.mxu0 0
      %640 = vmatprep.subr.bf16.mxu0 0
      %641 = vmatpush2.bf16.msra.mxu0 0
      %642 = vmatprep.subr.bf16.mxu0 0
      %643 = vmatpush2.bf16.msra.mxu0 0
      %644 = vmatprep.subr.bf16.mxu0 0
      %645 = vmatpush2.bf16.msra.mxu0 0
      %646 = vmatprep.subr.bf16.mxu0 0
      %647 = vmatpush2.bf16.msra.mxu0 0
      %648 = vmatprep.subr.bf16.mxu0 0
      %649 = vmatpush2.bf16.msra.mxu0 0
      %650 = vmatprep.subr.bf16.mxu0 0
      %651 = vmatpush2.bf16.msra.mxu0 0
      %652 = vmatprep.subr.bf16.mxu0 0
      %653 = vmatpush2.bf16.msra.mxu0 0
      %654 = vmatprep.mubr.bf16.mxu0 0
      %655 = vmatmul.mubr.bf16.gmra.mxu0 %v605
      %v656 = vpop.f32.mrf.mxu0
      %v657 = vadd.f32 0.0, %v656
      %v658 = vpop.f32.mrf.mxu0
      %v659 = vpop.f32.mrf.mxu0
      %v660 = vadd.f32 0.0, %v659
      %v661 = vpop.f32.mrf.mxu0
      %662 = vmatprep.mubr.bf16.mxu0 0
      %663 = vmatmul.mubr.bf16.gmra.mxu0 %v608
      %v664 = vpop.f32.mrf.mxu0
      %v665 = vadd.f32 0.0, %v664
      %v666 = vpop.f32.mrf.mxu0
      %v667 = vpop.f32.mrf.mxu0
      %v668 = vadd.f32 0.0, %v667
      %v669 = vpop.f32.mrf.mxu0
      %670 = vmatprep.mubr.bf16.mxu0 0
      %671 = vmatmul.mubr.bf16.gmra.mxu0 %v611
      %v672 = vpop.f32.mrf.mxu0
      %v673 = vadd.f32 0.0, %v672
      %v674 = vpop.f32.mrf.mxu0
      %v675 = vpop.f32.mrf.mxu0
      %v676 = vadd.f32 0.0, %v675
      %v677 = vpop.f32.mrf.mxu0
      %678 = vmatprep.mubr.bf16.mxu0 0
      %679 = vmatmul.mubr.bf16.gmra.mxu0 %v614
      %v680 = vpop.f32.mrf.mxu0
      %v681 = vadd.f32 0.0, %v680
      %v682 = vpop.f32.mrf.mxu0
      %v683 = vpop.f32.mrf.mxu0
      %v684 = vadd.f32 0.0, %v683
      %v685 = vpop.f32.mrf.mxu0
      %686 = vmatprep.mubr.bf16.mxu0 0
      %687 = vmatmul.mubr.bf16.gmra.mxu0 %v617
      %v688 = vpop.f32.mrf.mxu0
      %v689 = vadd.f32 0.0, %v688
      %v690 = vpop.f32.mrf.mxu0
      %v691 = vpop.f32.mrf.mxu0
      %v692 = vadd.f32 0.0, %v691
      %v693 = vpop.f32.mrf.mxu0
      %694 = vmatprep.mubr.bf16.mxu0 0
      %695 = vmatmul.mubr.bf16.gmra.mxu0 %v620
      %v696 = vpop.f32.mrf.mxu0
      %v697 = vadd.f32 0.0, %v696
      %v698 = vpop.f32.mrf.mxu0
      %v699 = vpop.f32.mrf.mxu0
      %v700 = vpop.f32.mrf.mxu0
      %701 = vdwg.mxu0
      %v702 = vadd.f32 %v531, %v657
      %v703 = vadd.f32 %v534, %v660
      %v704 = vadd.f32 %v539, %v665
      %v705 = vadd.f32 %v542, %v668
      %v706 = vadd.f32 %v547, %v673
      %v707 = vadd.f32 %v550, %v676
      %v708 = vadd.f32 %v555, %v681
      %v709 = vadd.f32 %v558, %v684
      %v710 = vadd.f32 %v563, %v689
      %v711 = vadd.f32 %v566, %v692
      %v712 = vadd.f32 %v571, %v697
      %v713 = vld [vmem:[%s1 + $0x30] sm:$0xf]
      %v714 = vld [vmem:[%s1 + $0x34] sm:$0xf]
      %v715 = vld [vmem:[%s1 + $0x38] sm:$0xf]
      %v716 = vld [vmem:[%s1 + $0x3c] sm:$0xf]
      %v718 = vunpack.c.l.b16 %v264
      %v719 = vpack.c.b16 %v298, %v297
      %v720 = vpack.c.b16 %v300, %v299
      %v721 = vpack.c.b16 %v302, %v301
      %v722 = vpack.c.b16 %v304, %v303
      %v723 = vpack.c.b16 %v306, %v305
      %v724 = vpack.c.b16 %v718, %v718
      %v729 = vunpack.c.l.b16 %v713
      %v730 = vunpack.c.l.b16 %v714
      %v731 = vunpack.c.l.b16 %v715
      %v732 = vunpack.c.l.b16 %v716
      %v733 = vpack.c.b16 %v730, %v729
      %v734 = vpack.c.b16 %v732, %v731
      %v738 = vsel %vm373, %v719, 0
      %v741 = vsel %vm373, %v720, 0
      %v744 = vsel %vm373, %v721, 0
      %v747 = vsel %vm373, %v722, 0
      %v750 = vsel %vm373, %v723, 0
      %v753 = vsel %vm373, %v724, 0
      %755 = vmatprep.subr.bf16.mxu0 0
      %756 = vmatpush1.bf16.msra.mxu0 0
      %757 = vmatprep.subr.bf16.mxu0 0
      %758 = vmatpush1.bf16.msra.mxu0 0
      %759 = vmatprep.subr.bf16.mxu0 0
      %760 = vmatpush1.bf16.msra.mxu0 0
      %761 = vmatprep.subr.bf16.mxu0 0
      %762 = vmatpush1.bf16.msra.mxu0 0
      %763 = vmatprep.subr.bf16.mxu0 0
      %764 = vmatpush1.bf16.msra.mxu0 0
      %765 = vmatprep.subr.bf16.mxu0 0
      %766 = vmatpush1.bf16.msra.mxu0 0
      %767 = vmatprep.subr.bf16.mxu0 0
      %768 = vmatpush1.bf16.msra.mxu0 %v734
      %769 = vmatprep.subr.bf16.mxu0 0
      %770 = vmatpush1.bf16.msra.mxu0 %v733
      %771 = vmatprep.subr.bf16.mxu0 0
      %772 = vmatpush2.bf16.msra.mxu0 0
      %773 = vmatprep.subr.bf16.mxu0 0
      %774 = vmatpush2.bf16.msra.mxu0 0
      %775 = vmatprep.subr.bf16.mxu0 0
      %776 = vmatpush2.bf16.msra.mxu0 0
      %777 = vmatprep.subr.bf16.mxu0 0
      %778 = vmatpush2.bf16.msra.mxu0 0
      %779 = vmatprep.subr.bf16.mxu0 0
      %780 = vmatpush2.bf16.msra.mxu0 0
      %781 = vmatprep.subr.bf16.mxu0 0
      %782 = vmatpush2.bf16.msra.mxu0 0
      %783 = vmatprep.subr.bf16.mxu0 0
      %784 = vmatpush2.bf16.msra.mxu0 0
      %785 = vmatprep.subr.bf16.mxu0 0
      %786 = vmatpush2.bf16.msra.mxu0 0
      %787 = vmatprep.mubr.bf16.mxu0 0
      %788 = vmatmul.mubr.bf16.gmra.mxu0 %v738
      %v789 = vpop.f32.mrf.mxu0
      %v790 = vadd.f32 0.0, %v789
      %v791 = vpop.f32.mrf.mxu0
      %v792 = vpop.f32.mrf.mxu0
      %v793 = vadd.f32 0.0, %v792
      %v794 = vpop.f32.mrf.mxu0
      %795 = vmatprep.mubr.bf16.mxu0 0
      %796 = vmatmul.mubr.bf16.gmra.mxu0 %v741
      %v797 = vpop.f32.mrf.mxu0
      %v798 = vadd.f32 0.0, %v797
      %v799 = vpop.f32.mrf.mxu0
      %v800 = vpop.f32.mrf.mxu0
      %v801 = vadd.f32 0.0, %v800
      %v802 = vpop.f32.mrf.mxu0
      %803 = vmatprep.mubr.bf16.mxu0 0
      %804 = vmatmul.mubr.bf16.gmra.mxu0 %v744
      %v805 = vpop.f32.mrf.mxu0
      %v806 = vadd.f32 0.0, %v805
      %v807 = vpop.f32.mrf.mxu0
      %v808 = vpop.f32.mrf.mxu0
      %v809 = vadd.f32 0.0, %v808
      %v810 = vpop.f32.mrf.mxu0
      %811 = vmatprep.mubr.bf16.mxu0 0
      %812 = vmatmul.mubr.bf16.gmra.mxu0 %v747
      %v813 = vpop.f32.mrf.mxu0
      %v814 = vadd.f32 0.0, %v813
      %v815 = vpop.f32.mrf.mxu0
      %v816 = vpop.f32.mrf.mxu0
      %v817 = vadd.f32 0.0, %v816
      %v818 = vpop.f32.mrf.mxu0
      %819 = vmatprep.mubr.bf16.mxu0 0
      %820 = vmatmul.mubr.bf16.gmra.mxu0 %v750
      %v821 = vpop.f32.mrf.mxu0
      %v822 = vadd.f32 0.0, %v821
      %v823 = vpop.f32.mrf.mxu0
      %v824 = vpop.f32.mrf.mxu0
      %v825 = vadd.f32 0.0, %v824
      %v826 = vpop.f32.mrf.mxu0
      %827 = vmatprep.mubr.bf16.mxu0 0
      %828 = vmatmul.mubr.bf16.gmra.mxu0 %v753
      %v829 = vpop.f32.mrf.mxu0
      %v830 = vadd.f32 0.0, %v829
      %v831 = vpop.f32.mrf.mxu0
      %v832 = vpop.f32.mrf.mxu0
      %v833 = vpop.f32.mrf.mxu0
      %834 = vdwg.mxu0
      %v835 = vadd.f32 %v702, %v790
      %v836 = vadd.f32 %v703, %v793
      %v837 = vadd.f32 %v704, %v798
      %v838 = vadd.f32 %v705, %v801
      %v839 = vadd.f32 %v706, %v806
      %v840 = vadd.f32 %v707, %v809
      %v841 = vadd.f32 %v708, %v814
      %v842 = vadd.f32 %v709, %v817
      %v843 = vadd.f32 %v710, %v822
      %v844 = vadd.f32 %v711, %v825
      %v845 = vadd.f32 %v712, %v830
      %v846 = vld [vmem:[%s1 + $0x40] sm:$0xf]
      %v847 = vld [vmem:[%s1 + $0x44] sm:$0xf]
      %v848 = vld [vmem:[%s1 + $0x48] sm:$0xf]
      %v849 = vld [vmem:[%s1 + $0x4c] sm:$0xf]
      %v850 = vshrl.u32 %v719, 16
      %v852 = vshll.u32 %v719, 16
      %v854 = vrot.slane %v852, 1
      %v855 = vor.u32 %v850, %v854
      %v856 = vshll.u32 %v720, 16
      %v858 = vrot.slane %v856, 1
      %v859 = vsel %vm313, %v855, %v858
      %v860 = vshrl.u32 %v720, 16
      %v862 = vor.u32 %v860, %v858
      %v863 = vshll.u32 %v721, 16
      %v865 = vrot.slane %v863, 1
      %v866 = vsel %vm313, %v862, %v865
      %v867 = vshrl.u32 %v721, 16
      %v869 = vor.u32 %v867, %v865
      %v870 = vshll.u32 %v722, 16
      %v872 = vrot.slane %v870, 1
      %v873 = vsel %vm313, %v869, %v872
      %v874 = vshrl.u32 %v722, 16
      %v876 = vor.u32 %v874, %v872
      %v877 = vshll.u32 %v723, 16
      %v879 = vrot.slane %v877, 1
      %v880 = vsel %vm313, %v876, %v879
      %v881 = vshrl.u32 %v723, 16
      %v883 = vor.u32 %v881, %v879
      %v884 = vshll.u32 %v724, 16
      %v886 = vrot.slane %v884, 1
      %v887 = vsel %vm313, %v883, %v886
      %v888 = vshrl.u32 %v724, 16
      %v890 = vor.u32 %v888, %v886
      %v895 = vunpack.c.l.b16 %v846
      %v896 = vunpack.c.l.b16 %v847
      %v897 = vunpack.c.l.b16 %v848
      %v898 = vunpack.c.l.b16 %v849
      %v899 = vpack.c.b16 %v896, %v895
      %v900 = vpack.c.b16 %v898, %v897
      %v904 = vsel %vm373, %v859, 0
      %v907 = vsel %vm373, %v866, 0
      %v910 = vsel %vm373, %v873, 0
      %v913 = vsel %vm373, %v880, 0
      %v916 = vsel %vm373, %v887, 0
      %v919 = vsel %vm373, %v890, 0
      %921 = vmatprep.subr.bf16.mxu0 0
      %922 = vmatpush1.bf16.msra.mxu0 0
      %923 = vmatprep.subr.bf16.mxu0 0
      %924 = vmatpush1.bf16.msra.mxu0 0
      %925 = vmatprep.subr.bf16.mxu0 0
      %926 = vmatpush1.bf16.msra.mxu0 0
      %927 = vmatprep.subr.bf16.mxu0 0
      %928 = vmatpush1.bf16.msra.mxu0 0
      %929 = vmatprep.subr.bf16.mxu0 0
      %930 = vmatpush1.bf16.msra.mxu0 0
      %931 = vmatprep.subr.bf16.mxu0 0
      %932 = vmatpush1.bf16.msra.mxu0 0
      %933 = vmatprep.subr.bf16.mxu0 0
      %934 = vmatpush1.bf16.msra.mxu0 %v900
      %935 = vmatprep.subr.bf16.mxu0 0
      %936 = vmatpush1.bf16.msra.mxu0 %v899
      %937 = vmatprep.subr.bf16.mxu0 0
      %938 = vmatpush2.bf16.msra.mxu0 0
      %939 = vmatprep.subr.bf16.mxu0 0
      %940 = vmatpush2.bf16.msra.mxu0 0
      %941 = vmatprep.subr.bf16.mxu0 0
      %942 = vmatpush2.bf16.msra.mxu0 0
      %943 = vmatprep.subr.bf16.mxu0 0
      %944 = vmatpush2.bf16.msra.mxu0 0
      %945 = vmatprep.subr.bf16.mxu0 0
      %946 = vmatpush2.bf16.msra.mxu0 0
      %947 = vmatprep.subr.bf16.mxu0 0
      %948 = vmatpush2.bf16.msra.mxu0 0
      %949 = vmatprep.subr.bf16.mxu0 0
      %950 = vmatpush2.bf16.msra.mxu0 0
      %951 = vmatprep.subr.bf16.mxu0 0
      %952 = vmatpush2.bf16.msra.mxu0 0
      %953 = vmatprep.mubr.bf16.mxu0 0
      %954 = vmatmul.mubr.bf16.gmra.mxu0 %v904
      %v955 = vpop.f32.mrf.mxu0
      %v956 = vadd.f32 0.0, %v955
      %v957 = vpop.f32.mrf.mxu0
      %v958 = vpop.f32.mrf.mxu0
      %v959 = vadd.f32 0.0, %v958
      %v960 = vpop.f32.mrf.mxu0
      %961 = vmatprep.mubr.bf16.mxu0 0
      %962 = vmatmul.mubr.bf16.gmra.mxu0 %v907
      %v963 = vpop.f32.mrf.mxu0
      %v964 = vadd.f32 0.0, %v963
      %v965 = vpop.f32.mrf.mxu0
      %v966 = vpop.f32.mrf.mxu0
      %v967 = vadd.f32 0.0, %v966
      %v968 = vpop.f32.mrf.mxu0
      %969 = vmatprep.mubr.bf16.mxu0 0
      %970 = vmatmul.mubr.bf16.gmra.mxu0 %v910
      %v971 = vpop.f32.mrf.mxu0
      %v972 = vadd.f32 0.0, %v971
      %v973 = vpop.f32.mrf.mxu0
      %v974 = vpop.f32.mrf.mxu0
      %v975 = vadd.f32 0.0, %v974
      %v976 = vpop.f32.mrf.mxu0
      %977 = vmatprep.mubr.bf16.mxu0 0
      %978 = vmatmul.mubr.bf16.gmra.mxu0 %v913
      %v979 = vpop.f32.mrf.mxu0
      %v980 = vadd.f32 0.0, %v979
      %v981 = vpop.f32.mrf.mxu0
      %v982 = vpop.f32.mrf.mxu0
      %v983 = vadd.f32 0.0, %v982
      %v984 = vpop.f32.mrf.mxu0
      %985 = vmatprep.mubr.bf16.mxu0 0
      %986 = vmatmul.mubr.bf16.gmra.mxu0 %v916
      %v987 = vpop.f32.mrf.mxu0
      %v988 = vadd.f32 0.0, %v987
      %v989 = vpop.f32.mrf.mxu0
      %v990 = vpop.f32.mrf.mxu0
      %v991 = vadd.f32 0.0, %v990
      %v992 = vpop.f32.mrf.mxu0
      %993 = vmatprep.mubr.bf16.mxu0 0
      %994 = vmatmul.mubr.bf16.gmra.mxu0 %v919
      %v995 = vpop.f32.mrf.mxu0
      %v996 = vadd.f32 0.0, %v995
      %v997 = vpop.f32.mrf.mxu0
      %v998 = vpop.f32.mrf.mxu0
      %v999 = vpop.f32.mrf.mxu0
      %1000 = vdwg.mxu0
      %v1001 = vadd.f32 %v835, %v956
      %v1002 = vadd.f32 %v836, %v959
      %v1003 = vadd.f32 %v837, %v964
      %v1004 = vadd.f32 %v838, %v967
      %v1005 = vadd.f32 %v839, %v972
      %v1006 = vadd.f32 %v840, %v975
      %v1007 = vadd.f32 %v841, %v980
      %v1008 = vadd.f32 %v842, %v983
      %v1009 = vadd.f32 %v843, %v988
      %v1010 = vadd.f32 %v844, %v991
      %v1011 = vadd.f32 %v845, %v996
      %v1012 = vld [vmem:[%s1 + $0x50] sm:$0xf]
      %v1013 = vld [vmem:[%s1 + $0x54] sm:$0xf]
      %v1014 = vld [vmem:[%s1 + $0x58] sm:$0xf]
      %v1015 = vld [vmem:[%s1 + $0x5c] sm:$0xf]
      %v1016 = vrot.slane %v719, 1
      %v1017 = vrot.slane %v720, 1
      %v1018 = vsel %vm580, %v1016, %v1017
      %v1019 = vrot.slane %v721, 1
      %v1020 = vsel %vm580, %v1017, %v1019
      %v1021 = vrot.slane %v722, 1
      %v1022 = vsel %vm580, %v1019, %v1021
      %v1023 = vrot.slane %v723, 1
      %v1024 = vsel %vm580, %v1021, %v1023
      %v1025 = vrot.slane %v724, 1
      %v1026 = vsel %vm580, %v1023, %v1025
      %v1031 = vunpack.c.l.b16 %v1012
      %v1032 = vunpack.c.l.b16 %v1013
      %v1033 = vunpack.c.l.b16 %v1014
      %v1034 = vunpack.c.l.b16 %v1015
      %v1035 = vpack.c.b16 %v1032, %v1031
      %v1036 = vpack.c.b16 %v1034, %v1033
      %v1040 = vsel %vm373, %v1018, 0
      %v1043 = vsel %vm373, %v1020, 0
      %v1046 = vsel %vm373, %v1022, 0
      %v1049 = vsel %vm373, %v1024, 0
      %v1052 = vsel %vm373, %v1026, 0
      %v1055 = vsel %vm373, %v1025, 0
      %1057 = vmatprep.subr.bf16.mxu0 0
      %1058 = vmatpush1.bf16.msra.mxu0 0
      %1059 = vmatprep.subr.bf16.mxu0 0
      %1060 = vmatpush1.bf16.msra.mxu0 0
      %1061 = vmatprep.subr.bf16.mxu0 0
      %1062 = vmatpush1.bf16.msra.mxu0 0
      %1063 = vmatprep.subr.bf16.mxu0 0
      %1064 = vmatpush1.bf16.msra.mxu0 0
      %1065 = vmatprep.subr.bf16.mxu0 0
      %1066 = vmatpush1.bf16.msra.mxu0 0
      %1067 = vmatprep.subr.bf16.mxu0 0
      %1068 = vmatpush1.bf16.msra.mxu0 0
      %1069 = vmatprep.subr.bf16.mxu0 0
      %1070 = vmatpush1.bf16.msra.mxu0 %v1036
      %1071 = vmatprep.subr.bf16.mxu0 0
      %1072 = vmatpush1.bf16.msra.mxu0 %v1035
      %1073 = vmatprep.subr.bf16.mxu0 0
      %1074 = vmatpush2.bf16.msra.mxu0 0
      %1075 = vmatprep.subr.bf16.mxu0 0
      %1076 = vmatpush2.bf16.msra.mxu0 0
      %1077 = vmatprep.subr.bf16.mxu0 0
      %1078 = vmatpush2.bf16.msra.mxu0 0
      %1079 = vmatprep.subr.bf16.mxu0 0
      %1080 = vmatpush2.bf16.msra.mxu0 0
      %1081 = vmatprep.subr.bf16.mxu0 0
      %1082 = vmatpush2.bf16.msra.mxu0 0
      %1083 = vmatprep.subr.bf16.mxu0 0
      %1084 = vmatpush2.bf16.msra.mxu0 0
      %1085 = vmatprep.subr.bf16.mxu0 0
      %1086 = vmatpush2.bf16.msra.mxu0 0
      %1087 = vmatprep.subr.bf16.mxu0 0
      %1088 = vmatpush2.bf16.msra.mxu0 0
      %1089 = vmatprep.mubr.bf16.mxu0 0
      %1090 = vmatmul.mubr.bf16.gmra.mxu0 %v1040
      %v1091 = vpop.f32.mrf.mxu0
      %v1092 = vadd.f32 0.0, %v1091
      %v1093 = vpop.f32.mrf.mxu0
      %v1094 = vpop.f32.mrf.mxu0
      %v1095 = vadd.f32 0.0, %v1094
      %v1096 = vpop.f32.mrf.mxu0
      %1097 = vmatprep.mubr.bf16.mxu0 0
      %1098 = vmatmul.mubr.bf16.gmra.mxu0 %v1043
      %v1099 = vpop.f32.mrf.mxu0
      %v1100 = vadd.f32 0.0, %v1099
      %v1101 = vpop.f32.mrf.mxu0
      %v1102 = vpop.f32.mrf.mxu0
      %v1103 = vadd.f32 0.0, %v1102
      %v1104 = vpop.f32.mrf.mxu0
      %1105 = vmatprep.mubr.bf16.mxu0 0
      %1106 = vmatmul.mubr.bf16.gmra.mxu0 %v1046
      %v1107 = vpop.f32.mrf.mxu0
      %v1108 = vadd.f32 0.0, %v1107
      %v1109 = vpop.f32.mrf.mxu0
      %v1110 = vpop.f32.mrf.mxu0
      %v1111 = vadd.f32 0.0, %v1110
      %v1112 = vpop.f32.mrf.mxu0
      %1113 = vmatprep.mubr.bf16.mxu0 0
      %1114 = vmatmul.mubr.bf16.gmra.mxu0 %v1049
      %v1115 = vpop.f32.mrf.mxu0
      %v1116 = vadd.f32 0.0, %v1115
      %v1117 = vpop.f32.mrf.mxu0
      %v1118 = vpop.f32.mrf.mxu0
      %v1119 = vadd.f32 0.0, %v1118
      %v1120 = vpop.f32.mrf.mxu0
      %1121 = vmatprep.mubr.bf16.mxu0 0
      %1122 = vmatmul.mubr.bf16.gmra.mxu0 %v1052
      %v1123 = vpop.f32.mrf.mxu0
      %v1124 = vadd.f32 0.0, %v1123
      %v1125 = vpop.f32.mrf.mxu0
      %v1126 = vpop.f32.mrf.mxu0
      %v1127 = vadd.f32 0.0, %v1126
      %v1128 = vpop.f32.mrf.mxu0
      %1129 = vmatprep.mubr.bf16.mxu0 0
      %1130 = vmatmul.mubr.bf16.gmra.mxu0 %v1055
      %v1131 = vpop.f32.mrf.mxu0
      %v1132 = vadd.f32 0.0, %v1131
      %v1133 = vpop.f32.mrf.mxu0
      %v1134 = vpop.f32.mrf.mxu0
      %v1135 = vpop.f32.mrf.mxu0
      %1136 = vdwg.mxu0
      %v1137 = vadd.f32 %v1001, %v1092
      %v1138 = vadd.f32 %v1002, %v1095
      %v1139 = vadd.f32 %v1003, %v1100
      %v1140 = vadd.f32 %v1004, %v1103
      %v1141 = vadd.f32 %v1005, %v1108
      %v1142 = vadd.f32 %v1006, %v1111
      %v1143 = vadd.f32 %v1007, %v1116
      %v1144 = vadd.f32 %v1008, %v1119
      %v1145 = vadd.f32 %v1009, %v1124
      %v1146 = vadd.f32 %v1010, %v1127
      %v1147 = vadd.f32 %v1011, %v1132
      %v1148 = vld [vmem:[%s1 + $0x60] sm:$0xf]
      %v1149 = vld [vmem:[%s1 + $0x64] sm:$0xf]
      %v1150 = vld [vmem:[%s1 + $0x68] sm:$0xf]
      %v1151 = vld [vmem:[%s1 + $0x6c] sm:$0xf]
      %v1153 = vunpack.c.l.b16 %v265
      %v1154 = vpack.c.b16 %v718, %v306
      %v1155 = vpack.c.b16 %v1153, %v1153
      %v1160 = vunpack.c.l.b16 %v1148
      %v1161 = vunpack.c.l.b16 %v1149
      %v1162 = vunpack.c.l.b16 %v1150
      %v1163 = vunpack.c.l.b16 %v1151
      %v1164 = vpack.c.b16 %v1161, %v1160
      %v1165 = vpack.c.b16 %v1163, %v1162
      %v1169 = vsel %vm373, %v1154, 0
      %v1172 = vsel %vm373, %v1155, 0
      %1174 = vmatprep.subr.bf16.mxu0 0
      %1175 = vmatpush1.bf16.msra.mxu0 0
      %1176 = vmatprep.subr.bf16.mxu0 0
      %1177 = vmatpush1.bf16.msra.mxu0 0
      %1178 = vmatprep.subr.bf16.mxu0 0
      %1179 = vmatpush1.bf16.msra.mxu0 0
      %1180 = vmatprep.subr.bf16.mxu0 0
      %1181 = vmatpush1.bf16.msra.mxu0 0
      %1182 = vmatprep.subr.bf16.mxu0 0
      %1183 = vmatpush1.bf16.msra.mxu0 0
      %1184 = vmatprep.subr.bf16.mxu0 0
      %1185 = vmatpush1.bf16.msra.mxu0 0
      %1186 = vmatprep.subr.bf16.mxu0 0
      %1187 = vmatpush1.bf16.msra.mxu0 %v1165
      %1188 = vmatprep.subr.bf16.mxu0 0
      %1189 = vmatpush1.bf16.msra.mxu0 %v1164
      %1190 = vmatprep.subr.bf16.mxu0 0
      %1191 = vmatpush2.bf16.msra.mxu0 0
      %1192 = vmatprep.subr.bf16.mxu0 0
      %1193 = vmatpush2.bf16.msra.mxu0 0
      %1194 = vmatprep.subr.bf16.mxu0 0
      %1195 = vmatpush2.bf16.msra.mxu0 0
      %1196 = vmatprep.subr.bf16.mxu0 0
      %1197 = vmatpush2.bf16.msra.mxu0 0
      %1198 = vmatprep.subr.bf16.mxu0 0
      %1199 = vmatpush2.bf16.msra.mxu0 0
      %1200 = vmatprep.subr.bf16.mxu0 0
      %1201 = vmatpush2.bf16.msra.mxu0 0
      %1202 = vmatprep.subr.bf16.mxu0 0
      %1203 = vmatpush2.bf16.msra.mxu0 0
      %1204 = vmatprep.subr.bf16.mxu0 0
      %1205 = vmatpush2.bf16.msra.mxu0 0
      %1206 = vmatprep.mubr.bf16.mxu0 0
      %1207 = vmatmul.mubr.bf16.gmra.mxu0 %v486
      %v1208 = vpop.f32.mrf.mxu0
      %v1209 = vadd.f32 0.0, %v1208
      %v1210 = vpop.f32.mrf.mxu0
      %v1211 = vpop.f32.mrf.mxu0
      %v1212 = vadd.f32 0.0, %v1211
      %v1213 = vpop.f32.mrf.mxu0
      %1214 = vmatprep.mubr.bf16.mxu0 0
      %1215 = vmatmul.mubr.bf16.gmra.mxu0 %v488
      %v1216 = vpop.f32.mrf.mxu0
      %v1217 = vadd.f32 0.0, %v1216
      %v1218 = vpop.f32.mrf.mxu0
      %v1219 = vpop.f32.mrf.mxu0
      %v1220 = vadd.f32 0.0, %v1219
      %v1221 = vpop.f32.mrf.mxu0
      %1222 = vmatprep.mubr.bf16.mxu0 0
      %1223 = vmatmul.mubr.bf16.gmra.mxu0 %v490
      %v1224 = vpop.f32.mrf.mxu0
      %v1225 = vadd.f32 0.0, %v1224
      %v1226 = vpop.f32.mrf.mxu0
      %v1227 = vpop.f32.mrf.mxu0
      %v1228 = vadd.f32 0.0, %v1227
      %v1229 = vpop.f32.mrf.mxu0
      %1230 = vmatprep.mubr.bf16.mxu0 0
      %1231 = vmatmul.mubr.bf16.gmra.mxu0 %v492
      %v1232 = vpop.f32.mrf.mxu0
      %v1233 = vadd.f32 0.0, %v1232
      %v1234 = vpop.f32.mrf.mxu0
      %v1235 = vpop.f32.mrf.mxu0
      %v1236 = vadd.f32 0.0, %v1235
      %v1237 = vpop.f32.mrf.mxu0
      %1238 = vmatprep.mubr.bf16.mxu0 0
      %1239 = vmatmul.mubr.bf16.gmra.mxu0 %v1169
      %v1240 = vpop.f32.mrf.mxu0
      %v1241 = vadd.f32 0.0, %v1240
      %v1242 = vpop.f32.mrf.mxu0
      %v1243 = vpop.f32.mrf.mxu0
      %v1244 = vadd.f32 0.0, %v1243
      %v1245 = vpop.f32.mrf.mxu0
      %1246 = vmatprep.mubr.bf16.mxu0 0
      %1247 = vmatmul.mubr.bf16.gmra.mxu0 %v1172
      %v1248 = vpop.f32.mrf.mxu0
      %v1249 = vadd.f32 0.0, %v1248
      %v1250 = vpop.f32.mrf.mxu0
      %v1251 = vpop.f32.mrf.mxu0
      %v1252 = vpop.f32.mrf.mxu0
      %1253 = vdwg.mxu0
      %v1254 = vadd.f32 %v1137, %v1209
      %v1255 = vadd.f32 %v1138, %v1212
      %v1256 = vadd.f32 %v1139, %v1217
      %v1257 = vadd.f32 %v1140, %v1220
      %v1258 = vadd.f32 %v1141, %v1225
      %v1259 = vadd.f32 %v1142, %v1228
      %v1260 = vadd.f32 %v1143, %v1233
      %v1261 = vadd.f32 %v1144, %v1236
      %v1262 = vadd.f32 %v1145, %v1241
      %v1263 = vadd.f32 %v1146, %v1244
      %v1264 = vadd.f32 %v1147, %v1249
      %v1265 = vld [vmem:[%s1 + $0x70] sm:$0xf]
      %v1266 = vld [vmem:[%s1 + $0x74] sm:$0xf]
      %v1267 = vld [vmem:[%s1 + $0x78] sm:$0xf]
      %v1268 = vld [vmem:[%s1 + $0x7c] sm:$0xf]
      %v1269 = vshll.u32 %v1154, 16
      %v1271 = vrot.slane %v1269, 1
      %v1272 = vsel %vm313, %v352, %v1271
      %v1273 = vshrl.u32 %v1154, 16
      %v1275 = vor.u32 %v1273, %v1271
      %v1276 = vshll.u32 %v1155, 16
      %v1278 = vrot.slane %v1276, 1
      %v1279 = vsel %vm313, %v1275, %v1278
      %v1280 = vshrl.u32 %v1155, 16
      %v1282 = vor.u32 %v1280, %v1278
      %v1287 = vunpack.c.l.b16 %v1265
      %v1288 = vunpack.c.l.b16 %v1266
      %v1289 = vunpack.c.l.b16 %v1267
      %v1290 = vunpack.c.l.b16 %v1268
      %v1291 = vpack.c.b16 %v1288, %v1287
      %v1292 = vpack.c.b16 %v1290, %v1289
      %v1296 = vsel %vm373, %v1272, 0
      %v1299 = vsel %vm373, %v1279, 0
      %v1302 = vsel %vm373, %v1282, 0
      %1304 = vmatprep.subr.bf16.mxu0 0
      %1305 = vmatpush1.bf16.msra.mxu0 0
      %1306 = vmatprep.subr.bf16.mxu0 0
      %1307 = vmatpush1.bf16.msra.mxu0 0
      %1308 = vmatprep.subr.bf16.mxu0 0
      %1309 = vmatpush1.bf16.msra.mxu0 0
      %1310 = vmatprep.subr.bf16.mxu0 0
      %1311 = vmatpush1.bf16.msra.mxu0 0
      %1312 = vmatprep.subr.bf16.mxu0 0
      %1313 = vmatpush1.bf16.msra.mxu0 0
      %1314 = vmatprep.subr.bf16.mxu0 0
      %1315 = vmatpush1.bf16.msra.mxu0 0
      %1316 = vmatprep.subr.bf16.mxu0 0
      %1317 = vmatpush1.bf16.msra.mxu0 %v1292
      %1318 = vmatprep.subr.bf16.mxu0 0
      %1319 = vmatpush1.bf16.msra.mxu0 %v1291
      %1320 = vmatprep.subr.bf16.mxu0 0
      %1321 = vmatpush2.bf16.msra.mxu0 0
      %1322 = vmatprep.subr.bf16.mxu0 0
      %1323 = vmatpush2.bf16.msra.mxu0 0
      %1324 = vmatprep.subr.bf16.mxu0 0
      %1325 = vmatpush2.bf16.msra.mxu0 0
      %1326 = vmatprep.subr.bf16.mxu0 0
      %1327 = vmatpush2.bf16.msra.mxu0 0
      %1328 = vmatprep.subr.bf16.mxu0 0
      %1329 = vmatpush2.bf16.msra.mxu0 0
      %1330 = vmatprep.subr.bf16.mxu0 0
      %1331 = vmatpush2.bf16.msra.mxu0 0
      %1332 = vmatprep.subr.bf16.mxu0 0
      %1333 = vmatpush2.bf16.msra.mxu0 0
      %1334 = vmatprep.subr.bf16.mxu0 0
      %1335 = vmatpush2.bf16.msra.mxu0 0
      %1336 = vmatprep.mubr.bf16.mxu0 0
      %1337 = vmatmul.mubr.bf16.gmra.mxu0 %v378
      %v1338 = vpop.f32.mrf.mxu0
      %v1339 = vadd.f32 0.0, %v1338
      %v1340 = vpop.f32.mrf.mxu0
      %v1341 = vpop.f32.mrf.mxu0
      %v1342 = vadd.f32 0.0, %v1341
      %v1343 = vpop.f32.mrf.mxu0
      %1344 = vmatprep.mubr.bf16.mxu0 0
      %1345 = vmatmul.mubr.bf16.gmra.mxu0 %v381
      %v1346 = vpop.f32.mrf.mxu0
      %v1347 = vadd.f32 0.0, %v1346
      %v1348 = vpop.f32.mrf.mxu0
      %v1349 = vpop.f32.mrf.mxu0
      %v1350 = vadd.f32 0.0, %v1349
      %v1351 = vpop.f32.mrf.mxu0
      %1352 = vmatprep.mubr.bf16.mxu0 0
      %1353 = vmatmul.mubr.bf16.gmra.mxu0 %v384
      %v1354 = vpop.f32.mrf.mxu0
      %v1355 = vadd.f32 0.0, %v1354
      %v1356 = vpop.f32.mrf.mxu0
      %v1357 = vpop.f32.mrf.mxu0
      %v1358 = vadd.f32 0.0, %v1357
      %v1359 = vpop.f32.mrf.mxu0
      %1360 = vmatprep.mubr.bf16.mxu0 0
      %1361 = vmatmul.mubr.bf16.gmra.mxu0 %v1296
      %v1362 = vpop.f32.mrf.mxu0
      %v1363 = vadd.f32 0.0, %v1362
      %v1364 = vpop.f32.mrf.mxu0
      %v1365 = vpop.f32.mrf.mxu0
      %v1366 = vadd.f32 0.0, %v1365
      %v1367 = vpop.f32.mrf.mxu0
      %1368 = vmatprep.mubr.bf16.mxu0 0
      %1369 = vmatmul.mubr.bf16.gmra.mxu0 %v1299
      %v1370 = vpop.f32.mrf.mxu0
      %v1371 = vadd.f32 0.0, %v1370
      %v1372 = vpop.f32.mrf.mxu0
      %v1373 = vpop.f32.mrf.mxu0
      %v1374 = vadd.f32 0.0, %v1373
      %v1375 = vpop.f32.mrf.mxu0
      %1376 = vmatprep.mubr.bf16.mxu0 0
      %1377 = vmatmul.mubr.bf16.gmra.mxu0 %v1302
      %v1378 = vpop.f32.mrf.mxu0
      %v1379 = vadd.f32 0.0, %v1378
      %v1380 = vpop.f32.mrf.mxu0
      %v1381 = vpop.f32.mrf.mxu0
      %v1382 = vpop.f32.mrf.mxu0
      %1383 = vdwg.mxu0
      %v1384 = vadd.f32 %v1254, %v1339
      %v1385 = vadd.f32 %v1255, %v1342
      %v1386 = vadd.f32 %v1256, %v1347
      %v1387 = vadd.f32 %v1257, %v1350
      %v1388 = vadd.f32 %v1258, %v1355
      %v1389 = vadd.f32 %v1259, %v1358
      %v1390 = vadd.f32 %v1260, %v1363
      %v1391 = vadd.f32 %v1261, %v1366
      %v1392 = vadd.f32 %v1262, %v1371
      %v1393 = vadd.f32 %v1263, %v1374
      %v1394 = vadd.f32 %v1264, %v1379
      %v1395 = vld [vmem:[%s1 + $0x80] sm:$0xf]
      %v1396 = vld [vmem:[%s1 + $0x84] sm:$0xf]
      %v1397 = vld [vmem:[%s1 + $0x88] sm:$0xf]
      %v1398 = vld [vmem:[%s1 + $0x8c] sm:$0xf]
      %v1399 = vrot.slane %v1154, 1
      %v1400 = vsel %vm580, %v588, %v1399
      %v1401 = vrot.slane %v1155, 1
      %v1402 = vsel %vm580, %v1399, %v1401
      %v1407 = vunpack.c.l.b16 %v1395
      %v1408 = vunpack.c.l.b16 %v1396
      %v1409 = vunpack.c.l.b16 %v1397
      %v1410 = vunpack.c.l.b16 %v1398
      %v1411 = vpack.c.b16 %v1408, %v1407
      %v1412 = vpack.c.b16 %v1410, %v1409
      %v1416 = vsel %vm373, %v1400, 0
      %v1419 = vsel %vm373, %v1402, 0
      %v1422 = vsel %vm373, %v1401, 0
      %1424 = vmatprep.subr.bf16.mxu0 0
      %1425 = vmatpush1.bf16.msra.mxu0 0
      %1426 = vmatprep.subr.bf16.mxu0 0
      %1427 = vmatpush1.bf16.msra.mxu0 0
      %1428 = vmatprep.subr.bf16.mxu0 0
      %1429 = vmatpush1.bf16.msra.mxu0 0
      %1430 = vmatprep.subr.bf16.mxu0 0
      %1431 = vmatpush1.bf16.msra.mxu0 0
      %1432 = vmatprep.subr.bf16.mxu0 0
      %1433 = vmatpush1.bf16.msra.mxu0 0
      %1434 = vmatprep.subr.bf16.mxu0 0
      %1435 = vmatpush1.bf16.msra.mxu0 0
      %1436 = vmatprep.subr.bf16.mxu0 0
      %1437 = vmatpush1.bf16.msra.mxu0 %v1412
      %1438 = vmatprep.subr.bf16.mxu0 0
      %1439 = vmatpush1.bf16.msra.mxu0 %v1411
      %1440 = vmatprep.subr.bf16.mxu0 0
      %1441 = vmatpush2.bf16.msra.mxu0 0
      %1442 = vmatprep.subr.bf16.mxu0 0
      %1443 = vmatpush2.bf16.msra.mxu0 0
      %1444 = vmatprep.subr.bf16.mxu0 0
      %1445 = vmatpush2.bf16.msra.mxu0 0
      %1446 = vmatprep.subr.bf16.mxu0 0
      %1447 = vmatpush2.bf16.msra.mxu0 0
      %1448 = vmatprep.subr.bf16.mxu0 0
      %1449 = vmatpush2.bf16.msra.mxu0 0
      %1450 = vmatprep.subr.bf16.mxu0 0
      %1451 = vmatpush2.bf16.msra.mxu0 0
      %1452 = vmatprep.subr.bf16.mxu0 0
      %1453 = vmatpush2.bf16.msra.mxu0 0
      %1454 = vmatprep.subr.bf16.mxu0 0
      %1455 = vmatpush2.bf16.msra.mxu0 0
      %1456 = vmatprep.mubr.bf16.mxu0 0
      %1457 = vmatmul.mubr.bf16.gmra.mxu0 %v608
      %v1458 = vpop.f32.mrf.mxu0
      %v1459 = vadd.f32 0.0, %v1458
      %v1460 = vpop.f32.mrf.mxu0
      %v1461 = vpop.f32.mrf.mxu0
      %v1462 = vadd.f32 0.0, %v1461
      %v1463 = vpop.f32.mrf.mxu0
      %1464 = vmatprep.mubr.bf16.mxu0 0
      %1465 = vmatmul.mubr.bf16.gmra.mxu0 %v611
      %v1466 = vpop.f32.mrf.mxu0
      %v1467 = vadd.f32 0.0, %v1466
      %v1468 = vpop.f32.mrf.mxu0
      %v1469 = vpop.f32.mrf.mxu0
      %v1470 = vadd.f32 0.0, %v1469
      %v1471 = vpop.f32.mrf.mxu0
      %1472 = vmatprep.mubr.bf16.mxu0 0
      %1473 = vmatmul.mubr.bf16.gmra.mxu0 %v614
      %v1474 = vpop.f32.mrf.mxu0
      %v1475 = vadd.f32 0.0, %v1474
      %v1476 = vpop.f32.mrf.mxu0
      %v1477 = vpop.f32.mrf.mxu0
      %v1478 = vadd.f32 0.0, %v1477
      %v1479 = vpop.f32.mrf.mxu0
      %1480 = vmatprep.mubr.bf16.mxu0 0
      %1481 = vmatmul.mubr.bf16.gmra.mxu0 %v1416
      %v1482 = vpop.f32.mrf.mxu0
      %v1483 = vadd.f32 0.0, %v1482
      %v1484 = vpop.f32.mrf.mxu0
      %v1485 = vpop.f32.mrf.mxu0
      %v1486 = vadd.f32 0.0, %v1485
      %v1487 = vpop.f32.mrf.mxu0
      %1488 = vmatprep.mubr.bf16.mxu0 0
      %1489 = vmatmul.mubr.bf16.gmra.mxu0 %v1419
      %v1490 = vpop.f32.mrf.mxu0
      %v1491 = vadd.f32 0.0, %v1490
      %v1492 = vpop.f32.mrf.mxu0
      %v1493 = vpop.f32.mrf.mxu0
      %v1494 = vadd.f32 0.0, %v1493
      %v1495 = vpop.f32.mrf.mxu0
      %1496 = vmatprep.mubr.bf16.mxu0 0
      %1497 = vmatmul.mubr.bf16.gmra.mxu0 %v1422
      %v1498 = vpop.f32.mrf.mxu0
      %v1499 = vadd.f32 0.0, %v1498
      %v1500 = vpop.f32.mrf.mxu0
      %v1501 = vpop.f32.mrf.mxu0
      %v1502 = vpop.f32.mrf.mxu0
      %1503 = vdwg.mxu0
      %v1504 = vadd.f32 %v1384, %v1459
      %v1505 = vadd.f32 %v1385, %v1462
      %v1506 = vadd.f32 %v1386, %v1467
      %v1507 = vadd.f32 %v1387, %v1470
      %v1508 = vadd.f32 %v1388, %v1475
      %v1509 = vadd.f32 %v1389, %v1478
      %v1510 = vadd.f32 %v1390, %v1483
      %v1511 = vadd.f32 %v1391, %v1486
      %v1512 = vadd.f32 %v1392, %v1491
      %v1513 = vadd.f32 %v1393, %v1494
      %v1514 = vadd.f32 %v1394, %v1499
      %v1515 = vld [vmem:[%s2] sm:$0x1]
      %v1517 = vlaneseq
      %v1518 = vshrl.u32 %v1517, 7
      %v1519 = vsub.s32 0, %v1518
      %v1520 = vrot.slane %v1515, %v1519
      %v1522 = vadd.f32 %v1504, %v1520
      %v1523 = vadd.f32 %v1505, %v1520
      %v1524 = vadd.f32 %v1506, %v1520
      %v1525 = vadd.f32 %v1507, %v1520
      %v1526 = vadd.f32 %v1508, %v1520
      %v1527 = vadd.f32 %v1509, %v1520
      %v1528 = vadd.f32 %v1510, %v1520
      %v1529 = vadd.f32 %v1511, %v1520
      %v1530 = vadd.f32 %v1512, %v1520
      %v1531 = vadd.f32 %v1513, %v1520
      %v1532 = vadd.f32 %v1514, %v1520
      %v1533 = vmul.f32 %v1522, 0.2
      %v1534 = vmul.f32 %v1523, 0.2
      %v1535 = vmul.f32 %v1524, 0.2
      %v1536 = vmul.f32 %v1525, 0.2
      %v1537 = vmul.f32 %v1526, 0.2
      %v1538 = vmul.f32 %v1527, 0.2
      %v1539 = vmul.f32 %v1528, 0.2
      %v1540 = vmul.f32 %v1529, 0.2
      %v1541 = vmul.f32 %v1530, 0.2
      %v1542 = vmul.f32 %v1531, 0.2
      %v1543 = vmul.f32 %v1532, 0.2
      %v1544 = vmax.f32 %v1522, %v1533
      %v1545 = vmax.f32 %v1523, %v1534
      %v1546 = vmax.f32 %v1524, %v1535
      %v1547 = vmax.f32 %v1525, %v1536
      %v1548 = vmax.f32 %v1526, %v1537
      %v1549 = vmax.f32 %v1527, %v1538
      %v1550 = vmax.f32 %v1528, %v1539
      %v1551 = vmax.f32 %v1529, %v1540
      %v1552 = vmax.f32 %v1530, %v1541
      %v1553 = vmax.f32 %v1531, %v1542
      %v1554 = vmax.f32 %v1532, %v1543
      %1556 = vset.pattern.permute.xlu0 0
      %1557 = vperm.xlu0 %1556, %v266
      %v1558 = vpop.permute.xlu0 %1557
      %1561 = vset.pattern.permute.xlu0 0
      %1562 = vperm.xlu0 %1561, %v267
      %v1563 = vpop.permute.xlu0 %1562
      %1566 = vset.pattern.permute.xlu0 0
      %1567 = vperm.xlu0 %1566, %v268
      %v1568 = vpop.permute.xlu0 %1567
      %1571 = vset.pattern.permute.xlu0 0
      %1572 = vperm.xlu0 %1571, %v269
      %v1573 = vpop.permute.xlu0 %1572
      %1576 = vset.pattern.permute.xlu0 0
      %1577 = vperm.xlu0 %1576, %v270
      %v1578 = vpop.permute.xlu0 %1577
      %1581 = vset.pattern.permute.xlu0 0
      %1582 = vperm.xlu0 %1581, %v271
      %v1583 = vpop.permute.xlu0 %1582
      %1586 = vset.pattern.permute.xlu0 0
      %1587 = vperm.xlu0 %1586, %v272
      %v1588 = vpop.permute.xlu0 %1587
      %1591 = vset.pattern.permute.xlu0 0
      %1592 = vperm.xlu0 %1591, %v273
      %v1593 = vpop.permute.xlu0 %1592
      %1596 = vset.pattern.permute.xlu0 0
      %1597 = vperm.xlu0 %1596, %v274
      %v1598 = vpop.permute.xlu0 %1597
      %1601 = vset.pattern.permute.xlu0 0
      %1602 = vperm.xlu0 %1601, %v275
      %v1603 = vpop.permute.xlu0 %1602
      %1606 = vset.pattern.permute.xlu0 0
      %1607 = vperm.xlu0 %1606, %v276
      %v1608 = vpop.permute.xlu0 %1607
      %v1610 = vmul.f32 %v1544, %v1558
      %v1611 = vmul.f32 %v1545, %v1563
      %v1612 = vmul.f32 %v1546, %v1568
      %v1613 = vmul.f32 %v1547, %v1573
      %v1614 = vmul.f32 %v1548, %v1578
      %v1615 = vmul.f32 %v1549, %v1583
      %v1616 = vmul.f32 %v1550, %v1588
      %v1617 = vmul.f32 %v1551, %v1593
      %v1618 = vmul.f32 %v1552, %v1598
      %v1619 = vmul.f32 %v1553, %v1603
      %v1620 = vmul.f32 %v1554, %v1608
      %v1621 = vpack.c.bf16 %v1611, %v1610
      %v1622 = vpack.c.bf16 %v1613, %v1612
      %v1623 = vpack.c.bf16 %v1615, %v1614
      %v1624 = vpack.c.bf16 %v1617, %v1616
      %v1625 = vpack.c.bf16 %v1619, %v1618
      %v1626 = vpack.c.bf16 %v1620, %v1620
      %v1627 = vld [vmem:[%s3] sm:$0xf]
      %v1628 = vld [vmem:[%s3 + $0x4] sm:$0xf]
      %v1629 = vld [vmem:[%s3 + $0x8] sm:$0xf]
      %v1630 = vld [vmem:[%s3 + $0xc] sm:$0xf]
      %v1631 = vld [vmem:[%s3 + $0x10] sm:$0xf]
      %v1632 = vld [vmem:[%s3 + $0x14] sm:$0xf]
      %v1633 = vld [vmem:[%s3 + $0x18] sm:$0xf]
      %v1634 = vld [vmem:[%s3 + $0x1c] sm:$0xf]
      %v1635 = vld [vmem:[%s3 + $0x20] sm:$0xf]
      %v1636 = vld [vmem:[%s3 + $0x24] sm:$0xf]
      %v1637 = vld [vmem:[%s3 + $0x28] sm:$0xf]
      %v1638 = vld [vmem:[%s3 + $0x2c] sm:$0xf]
      %v1639 = vld [vmem:[%s3 + $0x30] sm:$0xf]
      %v1640 = vld [vmem:[%s3 + $0x34] sm:$0xf]
      %v1641 = vld [vmem:[%s3 + $0x38] sm:$0xf]
      %v1642 = vld [vmem:[%s3 + $0x3c] sm:$0xf]
      %v1644 = vshrl.u32 %v1621, 16
      %v1646 = vshll.u32 %v1621, 16
      %v1648 = vrot.slane %v1646, 1
      %v1649 = vor.u32 %v1644, %v1648
      %v1651 = vshll.u32 %v1622, 16
      %v1653 = vrot.slane %v1651, 1
      %v1654 = vsel %vm313, %v1649, %v1653
      %v1655 = vshrl.u32 %v1622, 16
      %v1657 = vor.u32 %v1655, %v1653
      %v1659 = vshll.u32 %v1623, 16
      %v1661 = vrot.slane %v1659, 1
      %v1662 = vsel %vm313, %v1657, %v1661
      %v1663 = vshrl.u32 %v1623, 16
      %v1665 = vor.u32 %v1663, %v1661
      %v1667 = vshll.u32 %v1624, 16
      %v1669 = vrot.slane %v1667, 1
      %v1670 = vsel %vm313, %v1665, %v1669
      %v1671 = vshrl.u32 %v1624, 16
      %v1673 = vor.u32 %v1671, %v1669
      %v1675 = vshll.u32 %v1625, 16
      %v1677 = vrot.slane %v1675, 1
      %v1678 = vsel %vm313, %v1673, %v1677
      %v1687 = vunpack.c.l.b16 %v1635
      %v1688 = vunpack.c.l.b16 %v1636
      %v1689 = vunpack.c.l.b16 %v1637
      %v1690 = vunpack.c.l.b16 %v1638
      %v1691 = vunpack.c.l.b16 %v1639
      %v1692 = vunpack.c.l.b16 %v1640
      %v1693 = vunpack.c.l.b16 %v1641
      %v1694 = vunpack.c.l.b16 %v1642
      %v1695 = vpack.c.b16 %v1688, %v1687
      %v1696 = vpack.c.b16 %v1690, %v1689
      %v1697 = vpack.c.b16 %v1692, %v1691
      %v1698 = vpack.c.b16 %v1694, %v1693
      %vm1703 = vcmask 523264
      %v1705 = vsel %vm1703, %v1654, 0
      %v1708 = vsel %vm1703, %v1662, 0
      %v1711 = vsel %vm1703, %v1670, 0
      %v1714 = vsel %vm1703, %v1678, 0
      %1716 = vmatprep.subr.bf16.mxu0 0
      %1717 = vmatpush1.bf16.msra.mxu0 0
      %1718 = vmatprep.subr.bf16.mxu0 0
      %1719 = vmatpush1.bf16.msra.mxu0 0
      %1720 = vmatprep.subr.bf16.mxu0 0
      %1721 = vmatpush1.bf16.msra.mxu0 0
      %1722 = vmatprep.subr.bf16.mxu0 0
      %1723 = vmatpush1.bf16.msra.mxu0 0
      %1724 = vmatprep.subr.bf16.mxu0 0
      %1725 = vmatpush1.bf16.msra.mxu0 %v1698
      %1726 = vmatprep.subr.bf16.mxu0 0
      %1727 = vmatpush1.bf16.msra.mxu0 %v1697
      %1728 = vmatprep.subr.bf16.mxu0 0
      %1729 = vmatpush1.bf16.msra.mxu0 %v1696
      %1730 = vmatprep.subr.bf16.mxu0 0
      %1731 = vmatpush1.bf16.msra.mxu0 %v1695
      %1732 = vmatprep.subr.bf16.mxu0 0
      %1733 = vmatpush2.bf16.msra.mxu0 0
      %1734 = vmatprep.subr.bf16.mxu0 0
      %1735 = vmatpush2.bf16.msra.mxu0 0
      %1736 = vmatprep.subr.bf16.mxu0 0
      %1737 = vmatpush2.bf16.msra.mxu0 0
      %1738 = vmatprep.subr.bf16.mxu0 0
      %1739 = vmatpush2.bf16.msra.mxu0 0
      %1740 = vmatprep.subr.bf16.mxu0 0
      %1741 = vmatpush2.bf16.msra.mxu0 0
      %1742 = vmatprep.subr.bf16.mxu0 0
      %1743 = vmatpush2.bf16.msra.mxu0 0
      %1744 = vmatprep.subr.bf16.mxu0 0
      %1745 = vmatpush2.bf16.msra.mxu0 0
      %1746 = vmatprep.subr.bf16.mxu0 0
      %1747 = vmatpush2.bf16.msra.mxu0 0
      %1748 = vmatprep.mubr.bf16.mxu0 0
      %1749 = vmatmul.mubr.bf16.gmra.mxu0 %v1705
      %v1750 = vpop.f32.mrf.mxu0
      %v1751 = vadd.f32 0.0, %v1750
      %v1752 = vpop.f32.mrf.mxu0
      %v1753 = vpop.f32.mrf.mxu0
      %v1754 = vadd.f32 0.0, %v1753
      %v1755 = vpop.f32.mrf.mxu0
      %1756 = vmatprep.mubr.bf16.mxu0 0
      %1757 = vmatmul.mubr.bf16.gmra.mxu0 %v1708
      %v1758 = vpop.f32.mrf.mxu0
      %v1759 = vadd.f32 0.0, %v1758
      %v1760 = vpop.f32.mrf.mxu0
      %v1761 = vpop.f32.mrf.mxu0
      %v1762 = vadd.f32 0.0, %v1761
      %v1763 = vpop.f32.mrf.mxu0
      %1764 = vmatprep.mubr.bf16.mxu0 0
      %1765 = vmatmul.mubr.bf16.gmra.mxu0 %v1711
      %v1766 = vpop.f32.mrf.mxu0
      %v1767 = vadd.f32 0.0, %v1766
      %v1768 = vpop.f32.mrf.mxu0
      %v1769 = vpop.f32.mrf.mxu0
      %v1770 = vadd.f32 0.0, %v1769
      %v1771 = vpop.f32.mrf.mxu0
      %1772 = vmatprep.mubr.bf16.mxu0 0
      %1773 = vmatmul.mubr.bf16.gmra.mxu0 %v1714
      %v1774 = vpop.f32.mrf.mxu0
      %v1775 = vadd.f32 0.0, %v1774
      %v1776 = vpop.f32.mrf.mxu0
      %v1777 = vpop.f32.mrf.mxu0
      %v1778 = vadd.f32 0.0, %v1777
      %v1779 = vpop.f32.mrf.mxu0
      %1780 = vdwg.mxu0
      %v1789 = vunpack.c.l.b16 %v1627
      %v1790 = vunpack.c.l.b16 %v1628
      %v1791 = vunpack.c.l.b16 %v1629
      %v1792 = vunpack.c.l.b16 %v1630
      %v1793 = vunpack.c.l.b16 %v1631
      %v1794 = vunpack.c.l.b16 %v1632
      %v1795 = vunpack.c.l.b16 %v1633
      %v1796 = vunpack.c.l.b16 %v1634
      %v1797 = vpack.c.b16 %v1790, %v1789
      %v1798 = vpack.c.b16 %v1792, %v1791
      %v1799 = vpack.c.b16 %v1794, %v1793
      %v1800 = vpack.c.b16 %v1796, %v1795
      %v1805 = vsel %vm1703, %v1621, 0
      %v1807 = vsel %vm1703, %v1622, 0
      %v1809 = vsel %vm1703, %v1623, 0
      %v1811 = vsel %vm1703, %v1624, 0
      %1813 = vmatprep.subr.bf16.mxu0 0
      %1814 = vmatpush1.bf16.msra.mxu0 0
      %1815 = vmatprep.subr.bf16.mxu0 0
      %1816 = vmatpush1.bf16.msra.mxu0 0
      %1817 = vmatprep.subr.bf16.mxu0 0
      %1818 = vmatpush1.bf16.msra.mxu0 0
      %1819 = vmatprep.subr.bf16.mxu0 0
      %1820 = vmatpush1.bf16.msra.mxu0 0
      %1821 = vmatprep.subr.bf16.mxu0 0
      %1822 = vmatpush1.bf16.msra.mxu0 %v1800
      %1823 = vmatprep.subr.bf16.mxu0 0
      %1824 = vmatpush1.bf16.msra.mxu0 %v1799
      %1825 = vmatprep.subr.bf16.mxu0 0
      %1826 = vmatpush1.bf16.msra.mxu0 %v1798
      %1827 = vmatprep.subr.bf16.mxu0 0
      %1828 = vmatpush1.bf16.msra.mxu0 %v1797
      %1829 = vmatprep.subr.bf16.mxu0 0
      %1830 = vmatpush2.bf16.msra.mxu0 0
      %1831 = vmatprep.subr.bf16.mxu0 0
      %1832 = vmatpush2.bf16.msra.mxu0 0
      %1833 = vmatprep.subr.bf16.mxu0 0
      %1834 = vmatpush2.bf16.msra.mxu0 0
      %1835 = vmatprep.subr.bf16.mxu0 0
      %1836 = vmatpush2.bf16.msra.mxu0 0
      %1837 = vmatprep.subr.bf16.mxu0 0
      %1838 = vmatpush2.bf16.msra.mxu0 0
      %1839 = vmatprep.subr.bf16.mxu0 0
      %1840 = vmatpush2.bf16.msra.mxu0 0
      %1841 = vmatprep.subr.bf16.mxu0 0
      %1842 = vmatpush2.bf16.msra.mxu0 0
      %1843 = vmatprep.subr.bf16.mxu0 0
      %1844 = vmatpush2.bf16.msra.mxu0 0
      %1845 = vmatprep.mubr.bf16.mxu0 0
      %1846 = vmatmul.mubr.bf16.gmra.mxu0 %v1805
      %v1847 = vpop.f32.mrf.mxu0
      %v1848 = vadd.f32 %v1751, %v1847
      %v1849 = vpop.f32.mrf.mxu0
      %v1850 = vpop.f32.mrf.mxu0
      %v1851 = vadd.f32 %v1754, %v1850
      %v1852 = vpop.f32.mrf.mxu0
      %1853 = vmatprep.mubr.bf16.mxu0 0
      %1854 = vmatmul.mubr.bf16.gmra.mxu0 %v1807
      %v1855 = vpop.f32.mrf.mxu0
      %v1856 = vadd.f32 %v1759, %v1855
      %v1857 = vpop.f32.mrf.mxu0
      %v1858 = vpop.f32.mrf.mxu0
      %v1859 = vadd.f32 %v1762, %v1858
      %v1860 = vpop.f32.mrf.mxu0
      %1861 = vmatprep.mubr.bf16.mxu0 0
      %1862 = vmatmul.mubr.bf16.gmra.mxu0 %v1809
      %v1863 = vpop.f32.mrf.mxu0
      %v1864 = vadd.f32 %v1767, %v1863
      %v1865 = vpop.f32.mrf.mxu0
      %v1866 = vpop.f32.mrf.mxu0
      %v1867 = vadd.f32 %v1770, %v1866
      %v1868 = vpop.f32.mrf.mxu0
      %1869 = vmatprep.mubr.bf16.mxu0 0
      %1870 = vmatmul.mubr.bf16.gmra.mxu0 %v1811
      %v1871 = vpop.f32.mrf.mxu0
      %v1872 = vadd.f32 %v1775, %v1871
      %v1873 = vpop.f32.mrf.mxu0
      %v1874 = vpop.f32.mrf.mxu0
      %v1875 = vadd.f32 %v1778, %v1874
      %v1876 = vpop.f32.mrf.mxu0
      %1877 = vdwg.mxu0
      %v1878 = vld [vmem:[%s3 + $0x40] sm:$0xf]
      %v1879 = vld [vmem:[%s3 + $0x44] sm:$0xf]
      %v1880 = vld [vmem:[%s3 + $0x48] sm:$0xf]
      %v1881 = vld [vmem:[%s3 + $0x4c] sm:$0xf]
      %v1882 = vld [vmem:[%s3 + $0x50] sm:$0xf]
      %v1883 = vld [vmem:[%s3 + $0x54] sm:$0xf]
      %v1884 = vld [vmem:[%s3 + $0x58] sm:$0xf]
      %v1885 = vld [vmem:[%s3 + $0x5c] sm:$0xf]
      %v1891 = vrot.slane %v1621, 1
      %v1892 = vrot.slane %v1622, 1
      %v1893 = vsel %vm580, %v1891, %v1892
      %v1894 = vrot.slane %v1623, 1
      %v1895 = vsel %vm580, %v1892, %v1894
      %v1896 = vrot.slane %v1624, 1
      %v1897 = vsel %vm580, %v1894, %v1896
      %v1898 = vrot.slane %v1625, 1
      %v1899 = vsel %vm580, %v1896, %v1898
      %v1908 = vunpack.c.l.b16 %v1878
      %v1909 = vunpack.c.l.b16 %v1879
      %v1910 = vunpack.c.l.b16 %v1880
      %v1911 = vunpack.c.l.b16 %v1881
      %v1912 = vunpack.c.l.b16 %v1882
      %v1913 = vunpack.c.l.b16 %v1883
      %v1914 = vunpack.c.l.b16 %v1884
      %v1915 = vunpack.c.l.b16 %v1885
      %v1916 = vpack.c.b16 %v1909, %v1908
      %v1917 = vpack.c.b16 %v1911, %v1910
      %v1918 = vpack.c.b16 %v1913, %v1912
      %v1919 = vpack.c.b16 %v1915, %v1914
      %v1925 = vsel %vm1703, %v1893, 0
      %v1928 = vsel %vm1703, %v1895, 0
      %v1931 = vsel %vm1703, %v1897, 0
      %v1934 = vsel %vm1703, %v1899, 0
      %1936 = vmatprep.subr.bf16.mxu0 0
      %1937 = vmatpush1.bf16.msra.mxu0 0
      %1938 = vmatprep.subr.bf16.mxu0 0
      %1939 = vmatpush1.bf16.msra.mxu0 0
      %1940 = vmatprep.subr.bf16.mxu0 0
      %1941 = vmatpush1.bf16.msra.mxu0 0
      %1942 = vmatprep.subr.bf16.mxu0 0
      %1943 = vmatpush1.bf16.msra.mxu0 0
      %1944 = vmatprep.subr.bf16.mxu0 0
      %1945 = vmatpush1.bf16.msra.mxu0 %v1919
      %1946 = vmatprep.subr.bf16.mxu0 0
      %1947 = vmatpush1.bf16.msra.mxu0 %v1918
      %1948 = vmatprep.subr.bf16.mxu0 0
      %1949 = vmatpush1.bf16.msra.mxu0 %v1917
      %1950 = vmatprep.subr.bf16.mxu0 0
      %1951 = vmatpush1.bf16.msra.mxu0 %v1916
      %1952 = vmatprep.subr.bf16.mxu0 0
      %1953 = vmatpush2.bf16.msra.mxu0 0
      %1954 = vmatprep.subr.bf16.mxu0 0
      %1955 = vmatpush2.bf16.msra.mxu0 0
      %1956 = vmatprep.subr.bf16.mxu0 0
      %1957 = vmatpush2.bf16.msra.mxu0 0
      %1958 = vmatprep.subr.bf16.mxu0 0
      %1959 = vmatpush2.bf16.msra.mxu0 0
      %1960 = vmatprep.subr.bf16.mxu0 0
      %1961 = vmatpush2.bf16.msra.mxu0 0
      %1962 = vmatprep.subr.bf16.mxu0 0
      %1963 = vmatpush2.bf16.msra.mxu0 0
      %1964 = vmatprep.subr.bf16.mxu0 0
      %1965 = vmatpush2.bf16.msra.mxu0 0
      %1966 = vmatprep.subr.bf16.mxu0 0
      %1967 = vmatpush2.bf16.msra.mxu0 0
      %1968 = vmatprep.mubr.bf16.mxu0 0
      %1969 = vmatmul.mubr.bf16.gmra.mxu0 %v1925
      %v1970 = vpop.f32.mrf.mxu0
      %v1971 = vadd.f32 0.0, %v1970
      %v1972 = vpop.f32.mrf.mxu0
      %v1973 = vpop.f32.mrf.mxu0
      %v1974 = vadd.f32 0.0, %v1973
      %v1975 = vpop.f32.mrf.mxu0
      %1976 = vmatprep.mubr.bf16.mxu0 0
      %1977 = vmatmul.mubr.bf16.gmra.mxu0 %v1928
      %v1978 = vpop.f32.mrf.mxu0
      %v1979 = vadd.f32 0.0, %v1978
      %v1980 = vpop.f32.mrf.mxu0
      %v1981 = vpop.f32.mrf.mxu0
      %v1982 = vadd.f32 0.0, %v1981
      %v1983 = vpop.f32.mrf.mxu0
      %1984 = vmatprep.mubr.bf16.mxu0 0
      %1985 = vmatmul.mubr.bf16.gmra.mxu0 %v1931
      %v1986 = vpop.f32.mrf.mxu0
      %v1987 = vadd.f32 0.0, %v1986
      %v1988 = vpop.f32.mrf.mxu0
      %v1989 = vpop.f32.mrf.mxu0
      %v1990 = vadd.f32 0.0, %v1989
      %v1991 = vpop.f32.mrf.mxu0
      %1992 = vmatprep.mubr.bf16.mxu0 0
      %1993 = vmatmul.mubr.bf16.gmra.mxu0 %v1934
      %v1994 = vpop.f32.mrf.mxu0
      %v1995 = vadd.f32 0.0, %v1994
      %v1996 = vpop.f32.mrf.mxu0
      %v1997 = vpop.f32.mrf.mxu0
      %v1998 = vadd.f32 0.0, %v1997
      %v1999 = vpop.f32.mrf.mxu0
      %2000 = vdwg.mxu0
      %v2001 = vadd.f32 %v1848, %v1971
      %v2002 = vadd.f32 %v1851, %v1974
      %v2003 = vadd.f32 %v1856, %v1979
      %v2004 = vadd.f32 %v1859, %v1982
      %v2005 = vadd.f32 %v1864, %v1987
      %v2006 = vadd.f32 %v1867, %v1990
      %v2007 = vadd.f32 %v1872, %v1995
      %v2008 = vadd.f32 %v1875, %v1998
      %v2009 = vld [vmem:[%s3 + $0x60] sm:$0xf]
      %v2010 = vld [vmem:[%s3 + $0x64] sm:$0xf]
      %v2011 = vld [vmem:[%s3 + $0x68] sm:$0xf]
      %v2012 = vld [vmem:[%s3 + $0x6c] sm:$0xf]
      %v2013 = vld [vmem:[%s3 + $0x70] sm:$0xf]
      %v2014 = vld [vmem:[%s3 + $0x74] sm:$0xf]
      %v2015 = vld [vmem:[%s3 + $0x78] sm:$0xf]
      %v2016 = vld [vmem:[%s3 + $0x7c] sm:$0xf]
      %vm2017 = vcmask 1043456
      %v2018 = vrot.slane %v1621, 4
      %v2019 = vrot.slane %v1622, 4
      %v2020 = vsel %vm2017, %v2018, %v2019
      %v2021 = vrot.slane %v1623, 4
      %v2022 = vsel %vm2017, %v2019, %v2021
      %v2023 = vrot.slane %v1624, 4
      %v2024 = vsel %vm2017, %v2021, %v2023
      %v2025 = vrot.slane %v1625, 4
      %v2026 = vsel %vm2017, %v2023, %v2025
      %v2035 = vunpack.c.l.b16 %v2009
      %v2036 = vunpack.c.l.b16 %v2010
      %v2037 = vunpack.c.l.b16 %v2011
      %v2038 = vunpack.c.l.b16 %v2012
      %v2039 = vunpack.c.l.b16 %v2013
      %v2040 = vunpack.c.l.b16 %v2014
      %v2041 = vunpack.c.l.b16 %v2015
      %v2042 = vunpack.c.l.b16 %v2016
      %v2043 = vpack.c.b16 %v2036, %v2035
      %v2044 = vpack.c.b16 %v2038, %v2037
      %v2045 = vpack.c.b16 %v2040, %v2039
      %v2046 = vpack.c.b16 %v2042, %v2041
      %v2052 = vsel %vm1703, %v2020, 0
      %v2055 = vsel %vm1703, %v2022, 0
      %v2058 = vsel %vm1703, %v2024, 0
      %v2061 = vsel %vm1703, %v2026, 0
      %2063 = vmatprep.subr.bf16.mxu0 0
      %2064 = vmatpush1.bf16.msra.mxu0 0
      %2065 = vmatprep.subr.bf16.mxu0 0
      %2066 = vmatpush1.bf16.msra.mxu0 0
      %2067 = vmatprep.subr.bf16.mxu0 0
      %2068 = vmatpush1.bf16.msra.mxu0 0
      %2069 = vmatprep.subr.bf16.mxu0 0
      %2070 = vmatpush1.bf16.msra.mxu0 0
      %2071 = vmatprep.subr.bf16.mxu0 0
      %2072 = vmatpush1.bf16.msra.mxu0 %v2046
      %2073 = vmatprep.subr.bf16.mxu0 0
      %2074 = vmatpush1.bf16.msra.mxu0 %v2045
      %2075 = vmatprep.subr.bf16.mxu0 0
      %2076 = vmatpush1.bf16.msra.mxu0 %v2044
      %2077 = vmatprep.subr.bf16.mxu0 0
      %2078 = vmatpush1.bf16.msra.mxu0 %v2043
      %2079 = vmatprep.subr.bf16.mxu0 0
      %2080 = vmatpush2.bf16.msra.mxu0 0
      %2081 = vmatprep.subr.bf16.mxu0 0
      %2082 = vmatpush2.bf16.msra.mxu0 0
      %2083 = vmatprep.subr.bf16.mxu0 0
      %2084 = vmatpush2.bf16.msra.mxu0 0
      %2085 = vmatprep.subr.bf16.mxu0 0
      %2086 = vmatpush2.bf16.msra.mxu0 0
      %2087 = vmatprep.subr.bf16.mxu0 0
      %2088 = vmatpush2.bf16.msra.mxu0 0
      %2089 = vmatprep.subr.bf16.mxu0 0
      %2090 = vmatpush2.bf16.msra.mxu0 0
      %2091 = vmatprep.subr.bf16.mxu0 0
      %2092 = vmatpush2.bf16.msra.mxu0 0
      %2093 = vmatprep.subr.bf16.mxu0 0
      %2094 = vmatpush2.bf16.msra.mxu0 0
      %2095 = vmatprep.mubr.bf16.mxu0 0
      %2096 = vmatmul.mubr.bf16.gmra.mxu0 %v2052
      %v2097 = vpop.f32.mrf.mxu0
      %v2098 = vadd.f32 0.0, %v2097
      %v2099 = vpop.f32.mrf.mxu0
      %v2100 = vpop.f32.mrf.mxu0
      %v2101 = vadd.f32 0.0, %v2100
      %v2102 = vpop.f32.mrf.mxu0
      %2103 = vmatprep.mubr.bf16.mxu0 0
      %2104 = vmatmul.mubr.bf16.gmra.mxu0 %v2055
      %v2105 = vpop.f32.mrf.mxu0
      %v2106 = vadd.f32 0.0, %v2105
      %v2107 = vpop.f32.mrf.mxu0
      %v2108 = vpop.f32.mrf.mxu0
      %v2109 = vadd.f32 0.0, %v2108
      %v2110 = vpop.f32.mrf.mxu0
      %2111 = vmatprep.mubr.bf16.mxu0 0
      %2112 = vmatmul.mubr.bf16.gmra.mxu0 %v2058
      %v2113 = vpop.f32.mrf.mxu0
      %v2114 = vadd.f32 0.0, %v2113
      %v2115 = vpop.f32.mrf.mxu0
      %v2116 = vpop.f32.mrf.mxu0
      %v2117 = vadd.f32 0.0, %v2116
      %v2118 = vpop.f32.mrf.mxu0
      %2119 = vmatprep.mubr.bf16.mxu0 0
      %2120 = vmatmul.mubr.bf16.gmra.mxu0 %v2061
      %v2121 = vpop.f32.mrf.mxu0
      %v2122 = vadd.f32 0.0, %v2121
      %v2123 = vpop.f32.mrf.mxu0
      %v2124 = vpop.f32.mrf.mxu0
      %v2125 = vadd.f32 0.0, %v2124
      %v2126 = vpop.f32.mrf.mxu0
      %2127 = vdwg.mxu0
      %v2128 = vadd.f32 %v2001, %v2098
      %v2129 = vadd.f32 %v2002, %v2101
      %v2130 = vadd.f32 %v2003, %v2106
      %v2131 = vadd.f32 %v2004, %v2109
      %v2132 = vadd.f32 %v2005, %v2114
      %v2133 = vadd.f32 %v2006, %v2117
      %v2134 = vadd.f32 %v2007, %v2122
      %v2135 = vadd.f32 %v2008, %v2125
      %v2136 = vld [vmem:[%s3 + $0x80] sm:$0xf]
      %v2137 = vld [vmem:[%s3 + $0x84] sm:$0xf]
      %v2138 = vld [vmem:[%s3 + $0x88] sm:$0xf]
      %v2139 = vld [vmem:[%s3 + $0x8c] sm:$0xf]
      %v2140 = vld [vmem:[%s3 + $0x90] sm:$0xf]
      %v2141 = vld [vmem:[%s3 + $0x94] sm:$0xf]
      %v2142 = vld [vmem:[%s3 + $0x98] sm:$0xf]
      %v2143 = vld [vmem:[%s3 + $0x9c] sm:$0xf]
      %vm2144 = vsmask.f32 3328
      %v2145 = vrot.slane %v1644, 4
      %v2146 = vrot.slane %v1646, 5
      %v2147 = vor.u32 %v2145, %v2146
      %v2148 = vrot.slane %v1655, 4
      %v2149 = vrot.slane %v1651, 5
      %v2150 = vor.u32 %v2148, %v2149
      %v2151 = vsel %vm2144, %v2147, %v2150
      %v2152 = vrot.slane %v1663, 4
      %v2153 = vrot.slane %v1659, 5
      %v2154 = vor.u32 %v2152, %v2153
      %v2155 = vsel %vm2144, %v2150, %v2154
      %v2156 = vrot.slane %v1671, 4
      %v2157 = vrot.slane %v1667, 5
      %v2158 = vor.u32 %v2156, %v2157
      %v2159 = vsel %vm2144, %v2154, %v2158
      %v2160 = vshrl.u32 %v1625, 16
      %v2162 = vrot.slane %v2160, 4
      %v2163 = vrot.slane %v1675, 5
      %v2164 = vor.u32 %v2162, %v2163
      %v2165 = vsel %vm2144, %v2158, %v2164
      %v2174 = vunpack.c.l.b16 %v2136
      %v2175 = vunpack.c.l.b16 %v2137
      %v2176 = vunpack.c.l.b16 %v2138
      %v2177 = vunpack.c.l.b16 %v2139
      %v2178 = vunpack.c.l.b16 %v2140
      %v2179 = vunpack.c.l.b16 %v2141
      %v2180 = vunpack.c.l.b16 %v2142
      %v2181 = vunpack.c.l.b16 %v2143
      %v2182 = vpack.c.b16 %v2175, %v2174
      %v2183 = vpack.c.b16 %v2177, %v2176
      %v2184 = vpack.c.b16 %v2179, %v2178
      %v2185 = vpack.c.b16 %v2181, %v2180
      %v2191 = vsel %vm1703, %v2151, 0
      %v2194 = vsel %vm1703, %v2155, 0
      %v2197 = vsel %vm1703, %v2159, 0
      %v2200 = vsel %vm1703, %v2165, 0
      %2202 = vmatprep.subr.bf16.mxu0 0
      %2203 = vmatpush1.bf16.msra.mxu0 0
      %2204 = vmatprep.subr.bf16.mxu0 0
      %2205 = vmatpush1.bf16.msra.mxu0 0
      %2206 = vmatprep.subr.bf16.mxu0 0
      %2207 = vmatpush1.bf16.msra.mxu0 0
      %2208 = vmatprep.subr.bf16.mxu0 0
      %2209 = vmatpush1.bf16.msra.mxu0 0
      %2210 = vmatprep.subr.bf16.mxu0 0
      %2211 = vmatpush1.bf16.msra.mxu0 %v2185
      %2212 = vmatprep.subr.bf16.mxu0 0
      %2213 = vmatpush1.bf16.msra.mxu0 %v2184
      %2214 = vmatprep.subr.bf16.mxu0 0
      %2215 = vmatpush1.bf16.msra.mxu0 %v2183
      %2216 = vmatprep.subr.bf16.mxu0 0
      %2217 = vmatpush1.bf16.msra.mxu0 %v2182
      %2218 = vmatprep.subr.bf16.mxu0 0
      %2219 = vmatpush2.bf16.msra.mxu0 0
      %2220 = vmatprep.subr.bf16.mxu0 0
      %2221 = vmatpush2.bf16.msra.mxu0 0
      %2222 = vmatprep.subr.bf16.mxu0 0
      %2223 = vmatpush2.bf16.msra.mxu0 0
      %2224 = vmatprep.subr.bf16.mxu0 0
      %2225 = vmatpush2.bf16.msra.mxu0 0
      %2226 = vmatprep.subr.bf16.mxu0 0
      %2227 = vmatpush2.bf16.msra.mxu0 0
      %2228 = vmatprep.subr.bf16.mxu0 0
      %2229 = vmatpush2.bf16.msra.mxu0 0
      %2230 = vmatprep.subr.bf16.mxu0 0
      %2231 = vmatpush2.bf16.msra.mxu0 0
      %2232 = vmatprep.subr.bf16.mxu0 0
      %2233 = vmatpush2.bf16.msra.mxu0 0
      %2234 = vmatprep.mubr.bf16.mxu0 0
      %2235 = vmatmul.mubr.bf16.gmra.mxu0 %v2191
      %v2236 = vpop.f32.mrf.mxu0
      %v2237 = vadd.f32 0.0, %v2236
      %v2238 = vpop.f32.mrf.mxu0
      %v2239 = vpop.f32.mrf.mxu0
      %v2240 = vadd.f32 0.0, %v2239
      %v2241 = vpop.f32.mrf.mxu0
      %2242 = vmatprep.mubr.bf16.mxu0 0
      %2243 = vmatmul.mubr.bf16.gmra.mxu0 %v2194
      %v2244 = vpop.f32.mrf.mxu0
      %v2245 = vadd.f32 0.0, %v2244
      %v2246 = vpop.f32.mrf.mxu0
      %v2247 = vpop.f32.mrf.mxu0
      %v2248 = vadd.f32 0.0, %v2247
      %v2249 = vpop.f32.mrf.mxu0
      %2250 = vmatprep.mubr.bf16.mxu0 0
      %2251 = vmatmul.mubr.bf16.gmra.mxu0 %v2197
      %v2252 = vpop.f32.mrf.mxu0
      %v2253 = vadd.f32 0.0, %v2252
      %v2254 = vpop.f32.mrf.mxu0
      %v2255 = vpop.f32.mrf.mxu0
      %v2256 = vadd.f32 0.0, %v2255
      %v2257 = vpop.f32.mrf.mxu0
      %2258 = vmatprep.mubr.bf16.mxu0 0
      %2259 = vmatmul.mubr.bf16.gmra.mxu0 %v2200
      %v2260 = vpop.f32.mrf.mxu0
      %v2261 = vadd.f32 0.0, %v2260
      %v2262 = vpop.f32.mrf.mxu0
      %v2263 = vpop.f32.mrf.mxu0
      %v2264 = vadd.f32 0.0, %v2263
      %v2265 = vpop.f32.mrf.mxu0
      %2266 = vdwg.mxu0
      %v2267 = vadd.f32 %v2128, %v2237
      %v2268 = vadd.f32 %v2129, %v2240
      %v2269 = vadd.f32 %v2130, %v2245
      %v2270 = vadd.f32 %v2131, %v2248
      %v2271 = vadd.f32 %v2132, %v2253
      %v2272 = vadd.f32 %v2133, %v2256
      %v2273 = vadd.f32 %v2134, %v2261
      %v2274 = vadd.f32 %v2135, %v2264
      %v2275 = vld [vmem:[%s3 + $0xa0] sm:$0xf]
      %v2276 = vld [vmem:[%s3 + $0xa4] sm:$0xf]
      %v2277 = vld [vmem:[%s3 + $0xa8] sm:$0xf]
      %v2278 = vld [vmem:[%s3 + $0xac] sm:$0xf]
      %v2279 = vld [vmem:[%s3 + $0xb0] sm:$0xf]
      %v2280 = vld [vmem:[%s3 + $0xb4] sm:$0xf]
      %v2281 = vld [vmem:[%s3 + $0xb8] sm:$0xf]
      %v2282 = vld [vmem:[%s3 + $0xbc] sm:$0xf]
      %vm2283 = vcmask 1042432
      %v2284 = vrot.slane %v1621, 5
      %v2285 = vrot.slane %v1622, 5
      %v2286 = vsel %vm2283, %v2284, %v2285
      %v2287 = vrot.slane %v1623, 5
      %v2288 = vsel %vm2283, %v2285, %v2287
      %v2289 = vrot.slane %v1624, 5
      %v2290 = vsel %vm2283, %v2287, %v2289
      %v2291 = vrot.slane %v1625, 5
      %v2292 = vsel %vm2283, %v2289, %v2291
      %v2301 = vunpack.c.l.b16 %v2275
      %v2302 = vunpack.c.l.b16 %v2276
      %v2303 = vunpack.c.l.b16 %v2277
      %v2304 = vunpack.c.l.b16 %v2278
      %v2305 = vunpack.c.l.b16 %v2279
      %v2306 = vunpack.c.l.b16 %v2280
      %v2307 = vunpack.c.l.b16 %v2281
      %v2308 = vunpack.c.l.b16 %v2282
      %v2309 = vpack.c.b16 %v2302, %v2301
      %v2310 = vpack.c.b16 %v2304, %v2303
      %v2311 = vpack.c.b16 %v2306, %v2305
      %v2312 = vpack.c.b16 %v2308, %v2307
      %v2318 = vsel %vm1703, %v2286, 0
      %v2321 = vsel %vm1703, %v2288, 0
      %v2324 = vsel %vm1703, %v2290, 0
      %v2327 = vsel %vm1703, %v2292, 0
      %2329 = vmatprep.subr.bf16.mxu0 0
      %2330 = vmatpush1.bf16.msra.mxu0 0
      %2331 = vmatprep.subr.bf16.mxu0 0
      %2332 = vmatpush1.bf16.msra.mxu0 0
      %2333 = vmatprep.subr.bf16.mxu0 0
      %2334 = vmatpush1.bf16.msra.mxu0 0
      %2335 = vmatprep.subr.bf16.mxu0 0
      %2336 = vmatpush1.bf16.msra.mxu0 0
      %2337 = vmatprep.subr.bf16.mxu0 0
      %2338 = vmatpush1.bf16.msra.mxu0 %v2312
      %2339 = vmatprep.subr.bf16.mxu0 0
      %2340 = vmatpush1.bf16.msra.mxu0 %v2311
      %2341 = vmatprep.subr.bf16.mxu0 0
      %2342 = vmatpush1.bf16.msra.mxu0 %v2310
      %2343 = vmatprep.subr.bf16.mxu0 0
      %2344 = vmatpush1.bf16.msra.mxu0 %v2309
      %2345 = vmatprep.subr.bf16.mxu0 0
      %2346 = vmatpush2.bf16.msra.mxu0 0
      %2347 = vmatprep.subr.bf16.mxu0 0
      %2348 = vmatpush2.bf16.msra.mxu0 0
      %2349 = vmatprep.subr.bf16.mxu0 0
      %2350 = vmatpush2.bf16.msra.mxu0 0
      %2351 = vmatprep.subr.bf16.mxu0 0
      %2352 = vmatpush2.bf16.msra.mxu0 0
      %2353 = vmatprep.subr.bf16.mxu0 0
      %2354 = vmatpush2.bf16.msra.mxu0 0
      %2355 = vmatprep.subr.bf16.mxu0 0
      %2356 = vmatpush2.bf16.msra.mxu0 0
      %2357 = vmatprep.subr.bf16.mxu0 0
      %2358 = vmatpush2.bf16.msra.mxu0 0
      %2359 = vmatprep.subr.bf16.mxu0 0
      %2360 = vmatpush2.bf16.msra.mxu0 0
      %2361 = vmatprep.mubr.bf16.mxu0 0
      %2362 = vmatmul.mubr.bf16.gmra.mxu0 %v2318
      %v2363 = vpop.f32.mrf.mxu0
      %v2364 = vadd.f32 0.0, %v2363
      %v2365 = vpop.f32.mrf.mxu0
      %v2366 = vpop.f32.mrf.mxu0
      %v2367 = vadd.f32 0.0, %v2366
      %v2368 = vpop.f32.mrf.mxu0
      %2369 = vmatprep.mubr.bf16.mxu0 0
      %2370 = vmatmul.mubr.bf16.gmra.mxu0 %v2321
      %v2371 = vpop.f32.mrf.mxu0
      %v2372 = vadd.f32 0.0, %v2371
      %v2373 = vpop.f32.mrf.mxu0
      %v2374 = vpop.f32.mrf.mxu0
      %v2375 = vadd.f32 0.0, %v2374
      %v2376 = vpop.f32.mrf.mxu0
      %2377 = vmatprep.mubr.bf16.mxu0 0
      %2378 = vmatmul.mubr.bf16.gmra.mxu0 %v2324
      %v2379 = vpop.f32.mrf.mxu0
      %v2380 = vadd.f32 0.0, %v2379
      %v2381 = vpop.f32.mrf.mxu0
      %v2382 = vpop.f32.mrf.mxu0
      %v2383 = vadd.f32 0.0, %v2382
      %v2384 = vpop.f32.mrf.mxu0
      %2385 = vmatprep.mubr.bf16.mxu0 0
      %2386 = vmatmul.mubr.bf16.gmra.mxu0 %v2327
      %v2387 = vpop.f32.mrf.mxu0
      %v2388 = vadd.f32 0.0, %v2387
      %v2389 = vpop.f32.mrf.mxu0
      %v2390 = vpop.f32.mrf.mxu0
      %v2391 = vadd.f32 0.0, %v2390
      %v2392 = vpop.f32.mrf.mxu0
      %2393 = vdwg.mxu0
      %v2394 = vadd.f32 %v2267, %v2364
      %v2395 = vadd.f32 %v2268, %v2367
      %v2396 = vadd.f32 %v2269, %v2372
      %v2397 = vadd.f32 %v2270, %v2375
      %v2398 = vadd.f32 %v2271, %v2380
      %v2399 = vadd.f32 %v2272, %v2383
      %v2400 = vadd.f32 %v2273, %v2388
      %v2401 = vadd.f32 %v2274, %v2391
      %v2402 = vld [vmem:[%s3 + $0xc0] sm:$0xf]
      %v2403 = vld [vmem:[%s3 + $0xc4] sm:$0xf]
      %v2404 = vld [vmem:[%s3 + $0xc8] sm:$0xf]
      %v2405 = vld [vmem:[%s3 + $0xcc] sm:$0xf]
      %v2406 = vld [vmem:[%s3 + $0xd0] sm:$0xf]
      %v2407 = vld [vmem:[%s3 + $0xd4] sm:$0xf]
      %v2408 = vld [vmem:[%s3 + $0xd8] sm:$0xf]
      %v2409 = vld [vmem:[%s3 + $0xdc] sm:$0xf]
      %v2418 = vunpack.c.l.b16 %v2402
      %v2419 = vunpack.c.l.b16 %v2403
      %v2420 = vunpack.c.l.b16 %v2404
      %v2421 = vunpack.c.l.b16 %v2405
      %v2422 = vunpack.c.l.b16 %v2406
      %v2423 = vunpack.c.l.b16 %v2407
      %v2424 = vunpack.c.l.b16 %v2408
      %v2425 = vunpack.c.l.b16 %v2409
      %v2426 = vpack.c.b16 %v2419, %v2418
      %v2427 = vpack.c.b16 %v2421, %v2420
      %v2428 = vpack.c.b16 %v2423, %v2422
      %v2429 = vpack.c.b16 %v2425, %v2424
      %v2434 = vsel %vm1703, %v1625, 0
      %2436 = vmatprep.subr.bf16.mxu0 0
      %2437 = vmatpush1.bf16.msra.mxu0 0
      %2438 = vmatprep.subr.bf16.mxu0 0
      %2439 = vmatpush1.bf16.msra.mxu0 0
      %2440 = vmatprep.subr.bf16.mxu0 0
      %2441 = vmatpush1.bf16.msra.mxu0 0
      %2442 = vmatprep.subr.bf16.mxu0 0
      %2443 = vmatpush1.bf16.msra.mxu0 0
      %2444 = vmatprep.subr.bf16.mxu0 0
      %2445 = vmatpush1.bf16.msra.mxu0 %v2429
      %2446 = vmatprep.subr.bf16.mxu0 0
      %2447 = vmatpush1.bf16.msra.mxu0 %v2428
      %2448 = vmatprep.subr.bf16.mxu0 0
      %2449 = vmatpush1.bf16.msra.mxu0 %v2427
      %2450 = vmatprep.subr.bf16.mxu0 0
      %2451 = vmatpush1.bf16.msra.mxu0 %v2426
      %2452 = vmatprep.subr.bf16.mxu0 0
      %2453 = vmatpush2.bf16.msra.mxu0 0
      %2454 = vmatprep.subr.bf16.mxu0 0
      %2455 = vmatpush2.bf16.msra.mxu0 0
      %2456 = vmatprep.subr.bf16.mxu0 0
      %2457 = vmatpush2.bf16.msra.mxu0 0
      %2458 = vmatprep.subr.bf16.mxu0 0
      %2459 = vmatpush2.bf16.msra.mxu0 0
      %2460 = vmatprep.subr.bf16.mxu0 0
      %2461 = vmatpush2.bf16.msra.mxu0 0
      %2462 = vmatprep.subr.bf16.mxu0 0
      %2463 = vmatpush2.bf16.msra.mxu0 0
      %2464 = vmatprep.subr.bf16.mxu0 0
      %2465 = vmatpush2.bf16.msra.mxu0 0
      %2466 = vmatprep.subr.bf16.mxu0 0
      %2467 = vmatpush2.bf16.msra.mxu0 0
      %2468 = vmatprep.mubr.bf16.mxu0 0
      %2469 = vmatmul.mubr.bf16.gmra.mxu0 %v1807
      %v2470 = vpop.f32.mrf.mxu0
      %v2471 = vadd.f32 0.0, %v2470
      %v2472 = vpop.f32.mrf.mxu0
      %v2473 = vpop.f32.mrf.mxu0
      %v2474 = vadd.f32 0.0, %v2473
      %v2475 = vpop.f32.mrf.mxu0
      %2476 = vmatprep.mubr.bf16.mxu0 0
      %2477 = vmatmul.mubr.bf16.gmra.mxu0 %v1809
      %v2478 = vpop.f32.mrf.mxu0
      %v2479 = vadd.f32 0.0, %v2478
      %v2480 = vpop.f32.mrf.mxu0
      %v2481 = vpop.f32.mrf.mxu0
      %v2482 = vadd.f32 0.0, %v2481
      %v2483 = vpop.f32.mrf.mxu0
      %2484 = vmatprep.mubr.bf16.mxu0 0
      %2485 = vmatmul.mubr.bf16.gmra.mxu0 %v1811
      %v2486 = vpop.f32.mrf.mxu0
      %v2487 = vadd.f32 0.0, %v2486
      %v2488 = vpop.f32.mrf.mxu0
      %v2489 = vpop.f32.mrf.mxu0
      %v2490 = vadd.f32 0.0, %v2489
      %v2491 = vpop.f32.mrf.mxu0
      %2492 = vmatprep.mubr.bf16.mxu0 0
      %2493 = vmatmul.mubr.bf16.gmra.mxu0 %v2434
      %v2494 = vpop.f32.mrf.mxu0
      %v2495 = vadd.f32 0.0, %v2494
      %v2496 = vpop.f32.mrf.mxu0
      %v2497 = vpop.f32.mrf.mxu0
      %v2498 = vadd.f32 0.0, %v2497
      %v2499 = vpop.f32.mrf.mxu0
      %2500 = vdwg.mxu0
      %v2501 = vadd.f32 %v2394, %v2471
      %v2502 = vadd.f32 %v2395, %v2474
      %v2503 = vadd.f32 %v2396, %v2479
      %v2504 = vadd.f32 %v2397, %v2482
      %v2505 = vadd.f32 %v2398, %v2487
      %v2506 = vadd.f32 %v2399, %v2490
      %v2507 = vadd.f32 %v2400, %v2495
      %v2508 = vadd.f32 %v2401, %v2498
      %v2509 = vld [vmem:[%s3 + $0xe0] sm:$0xf]
      %v2510 = vld [vmem:[%s3 + $0xe4] sm:$0xf]
      %v2511 = vld [vmem:[%s3 + $0xe8] sm:$0xf]
      %v2512 = vld [vmem:[%s3 + $0xec] sm:$0xf]
      %v2513 = vld [vmem:[%s3 + $0xf0] sm:$0xf]
      %v2514 = vld [vmem:[%s3 + $0xf4] sm:$0xf]
      %v2515 = vld [vmem:[%s3 + $0xf8] sm:$0xf]
      %v2516 = vld [vmem:[%s3 + $0xfc] sm:$0xf]
      %v2517 = vor.u32 %v2160, %v1677
      %v2519 = vshll.u32 %v1626, 16
      %v2521 = vrot.slane %v2519, 1
      %v2522 = vsel %vm313, %v2517, %v2521
      %v2531 = vunpack.c.l.b16 %v2509
      %v2532 = vunpack.c.l.b16 %v2510
      %v2533 = vunpack.c.l.b16 %v2511
      %v2534 = vunpack.c.l.b16 %v2512
      %v2535 = vunpack.c.l.b16 %v2513
      %v2536 = vunpack.c.l.b16 %v2514
      %v2537 = vunpack.c.l.b16 %v2515
      %v2538 = vunpack.c.l.b16 %v2516
      %v2539 = vpack.c.b16 %v2532, %v2531
      %v2540 = vpack.c.b16 %v2534, %v2533
      %v2541 = vpack.c.b16 %v2536, %v2535
      %v2542 = vpack.c.b16 %v2538, %v2537
      %v2548 = vsel %vm1703, %v2522, 0
      %2550 = vmatprep.subr.bf16.mxu0 0
      %2551 = vmatpush1.bf16.msra.mxu0 0
      %2552 = vmatprep.subr.bf16.mxu0 0
      %2553 = vmatpush1.bf16.msra.mxu0 0
      %2554 = vmatprep.subr.bf16.mxu0 0
      %2555 = vmatpush1.bf16.msra.mxu0 0
      %2556 = vmatprep.subr.bf16.mxu0 0
      %2557 = vmatpush1.bf16.msra.mxu0 0
      %2558 = vmatprep.subr.bf16.mxu0 0
      %2559 = vmatpush1.bf16.msra.mxu0 %v2542
      %2560 = vmatprep.subr.bf16.mxu0 0
      %2561 = vmatpush1.bf16.msra.mxu0 %v2541
      %2562 = vmatprep.subr.bf16.mxu0 0
      %2563 = vmatpush1.bf16.msra.mxu0 %v2540
      %2564 = vmatprep.subr.bf16.mxu0 0
      %2565 = vmatpush1.bf16.msra.mxu0 %v2539
      %2566 = vmatprep.subr.bf16.mxu0 0
      %2567 = vmatpush2.bf16.msra.mxu0 0
      %2568 = vmatprep.subr.bf16.mxu0 0
      %2569 = vmatpush2.bf16.msra.mxu0 0
      %2570 = vmatprep.subr.bf16.mxu0 0
      %2571 = vmatpush2.bf16.msra.mxu0 0
      %2572 = vmatprep.subr.bf16.mxu0 0
      %2573 = vmatpush2.bf16.msra.mxu0 0
      %2574 = vmatprep.subr.bf16.mxu0 0
      %2575 = vmatpush2.bf16.msra.mxu0 0
      %2576 = vmatprep.subr.bf16.mxu0 0
      %2577 = vmatpush2.bf16.msra.mxu0 0
      %2578 = vmatprep.subr.bf16.mxu0 0
      %2579 = vmatpush2.bf16.msra.mxu0 0
      %2580 = vmatprep.subr.bf16.mxu0 0
      %2581 = vmatpush2.bf16.msra.mxu0 0
      %2582 = vmatprep.mubr.bf16.mxu0 0
      %2583 = vmatmul.mubr.bf16.gmra.mxu0 %v1708
      %v2584 = vpop.f32.mrf.mxu0
      %v2585 = vadd.f32 0.0, %v2584
      %v2586 = vpop.f32.mrf.mxu0
      %v2587 = vpop.f32.mrf.mxu0
      %v2588 = vadd.f32 0.0, %v2587
      %v2589 = vpop.f32.mrf.mxu0
      %2590 = vmatprep.mubr.bf16.mxu0 0
      %2591 = vmatmul.mubr.bf16.gmra.mxu0 %v1711
      %v2592 = vpop.f32.mrf.mxu0
      %v2593 = vadd.f32 0.0, %v2592
      %v2594 = vpop.f32.mrf.mxu0
      %v2595 = vpop.f32.mrf.mxu0
      %v2596 = vadd.f32 0.0, %v2595
      %v2597 = vpop.f32.mrf.mxu0
      %2598 = vmatprep.mubr.bf16.mxu0 0
      %2599 = vmatmul.mubr.bf16.gmra.mxu0 %v1714
      %v2600 = vpop.f32.mrf.mxu0
      %v2601 = vadd.f32 0.0, %v2600
      %v2602 = vpop.f32.mrf.mxu0
      %v2603 = vpop.f32.mrf.mxu0
      %v2604 = vadd.f32 0.0, %v2603
      %v2605 = vpop.f32.mrf.mxu0
      %2606 = vmatprep.mubr.bf16.mxu0 0
      %2607 = vmatmul.mubr.bf16.gmra.mxu0 %v2548
      %v2608 = vpop.f32.mrf.mxu0
      %v2609 = vadd.f32 0.0, %v2608
      %v2610 = vpop.f32.mrf.mxu0
      %v2611 = vpop.f32.mrf.mxu0
      %v2612 = vadd.f32 0.0, %v2611
      %v2613 = vpop.f32.mrf.mxu0
      %2614 = vdwg.mxu0
      %v2615 = vadd.f32 %v2501, %v2585
      %v2616 = vadd.f32 %v2502, %v2588
      %v2617 = vadd.f32 %v2503, %v2593
      %v2618 = vadd.f32 %v2504, %v2596
      %v2619 = vadd.f32 %v2505, %v2601
      %v2620 = vadd.f32 %v2506, %v2604
      %v2621 = vadd.f32 %v2507, %v2609
      %v2622 = vadd.f32 %v2508, %v2612
      %v2623 = vld [vmem:[%s3 + $0x100] sm:$0xf]
      %v2624 = vld [vmem:[%s3 + $0x104] sm:$0xf]
      %v2625 = vld [vmem:[%s3 + $0x108] sm:$0xf]
      %v2626 = vld [vmem:[%s3 + $0x10c] sm:$0xf]
      %v2627 = vld [vmem:[%s3 + $0x110] sm:$0xf]
      %v2628 = vld [vmem:[%s3 + $0x114] sm:$0xf]
      %v2629 = vld [vmem:[%s3 + $0x118] sm:$0xf]
      %v2630 = vld [vmem:[%s3 + $0x11c] sm:$0xf]
      %v2632 = vrot.slane %v1626, 1
      %v2633 = vsel %vm580, %v1898, %v2632
      %v2642 = vunpack.c.l.b16 %v2623
      %v2643 = vunpack.c.l.b16 %v2624
      %v2644 = vunpack.c.l.b16 %v2625
      %v2645 = vunpack.c.l.b16 %v2626
      %v2646 = vunpack.c.l.b16 %v2627
      %v2647 = vunpack.c.l.b16 %v2628
      %v2648 = vunpack.c.l.b16 %v2629
      %v2649 = vunpack.c.l.b16 %v2630
      %v2650 = vpack.c.b16 %v2643, %v2642
      %v2651 = vpack.c.b16 %v2645, %v2644
      %v2652 = vpack.c.b16 %v2647, %v2646
      %v2653 = vpack.c.b16 %v2649, %v2648
      %v2659 = vsel %vm1703, %v2633, 0
      %2661 = vmatprep.subr.bf16.mxu0 0
      %2662 = vmatpush1.bf16.msra.mxu0 0
      %2663 = vmatprep.subr.bf16.mxu0 0
      %2664 = vmatpush1.bf16.msra.mxu0 0
      %2665 = vmatprep.subr.bf16.mxu0 0
      %2666 = vmatpush1.bf16.msra.mxu0 0
      %2667 = vmatprep.subr.bf16.mxu0 0
      %2668 = vmatpush1.bf16.msra.mxu0 0
      %2669 = vmatprep.subr.bf16.mxu0 0
      %2670 = vmatpush1.bf16.msra.mxu0 %v2653
      %2671 = vmatprep.subr.bf16.mxu0 0
      %2672 = vmatpush1.bf16.msra.mxu0 %v2652
      %2673 = vmatprep.subr.bf16.mxu0 0
      %2674 = vmatpush1.bf16.msra.mxu0 %v2651
      %2675 = vmatprep.subr.bf16.mxu0 0
      %2676 = vmatpush1.bf16.msra.mxu0 %v2650
      %2677 = vmatprep.subr.bf16.mxu0 0
      %2678 = vmatpush2.bf16.msra.mxu0 0
      %2679 = vmatprep.subr.bf16.mxu0 0
      %2680 = vmatpush2.bf16.msra.mxu0 0
      %2681 = vmatprep.subr.bf16.mxu0 0
      %2682 = vmatpush2.bf16.msra.mxu0 0
      %2683 = vmatprep.subr.bf16.mxu0 0
      %2684 = vmatpush2.bf16.msra.mxu0 0
      %2685 = vmatprep.subr.bf16.mxu0 0
      %2686 = vmatpush2.bf16.msra.mxu0 0
      %2687 = vmatprep.subr.bf16.mxu0 0
      %2688 = vmatpush2.bf16.msra.mxu0 0
      %2689 = vmatprep.subr.bf16.mxu0 0
      %2690 = vmatpush2.bf16.msra.mxu0 0
      %2691 = vmatprep.subr.bf16.mxu0 0
      %2692 = vmatpush2.bf16.msra.mxu0 0
      %2693 = vmatprep.mubr.bf16.mxu0 0
      %2694 = vmatmul.mubr.bf16.gmra.mxu0 %v1928
      %v2695 = vpop.f32.mrf.mxu0
      %v2696 = vadd.f32 0.0, %v2695
      %v2697 = vpop.f32.mrf.mxu0
      %v2698 = vpop.f32.mrf.mxu0
      %v2699 = vadd.f32 0.0, %v2698
      %v2700 = vpop.f32.mrf.mxu0
      %2701 = vmatprep.mubr.bf16.mxu0 0
      %2702 = vmatmul.mubr.bf16.gmra.mxu0 %v1931
      %v2703 = vpop.f32.mrf.mxu0
      %v2704 = vadd.f32 0.0, %v2703
      %v2705 = vpop.f32.mrf.mxu0
      %v2706 = vpop.f32.mrf.mxu0
      %v2707 = vadd.f32 0.0, %v2706
      %v2708 = vpop.f32.mrf.mxu0
      %2709 = vmatprep.mubr.bf16.mxu0 0
      %2710 = vmatmul.mubr.bf16.gmra.mxu0 %v1934
      %v2711 = vpop.f32.mrf.mxu0
      %v2712 = vadd.f32 0.0, %v2711
      %v2713 = vpop.f32.mrf.mxu0
      %v2714 = vpop.f32.mrf.mxu0
      %v2715 = vadd.f32 0.0, %v2714
      %v2716 = vpop.f32.mrf.mxu0
      %2717 = vmatprep.mubr.bf16.mxu0 0
      %2718 = vmatmul.mubr.bf16.gmra.mxu0 %v2659
      %v2719 = vpop.f32.mrf.mxu0
      %v2720 = vadd.f32 0.0, %v2719
      %v2721 = vpop.f32.mrf.mxu0
      %v2722 = vpop.f32.mrf.mxu0
      %v2723 = vadd.f32 0.0, %v2722
      %v2724 = vpop.f32.mrf.mxu0
      %2725 = vdwg.mxu0
      %v2726 = vadd.f32 %v2615, %v2696
      %v2727 = vadd.f32 %v2616, %v2699
      %v2728 = vadd.f32 %v2617, %v2704
      %v2729 = vadd.f32 %v2618, %v2707
      %v2730 = vadd.f32 %v2619, %v2712
      %v2731 = vadd.f32 %v2620, %v2715
      %v2732 = vadd.f32 %v2621, %v2720
      %v2733 = vadd.f32 %v2622, %v2723
      %v2734 = vld [vmem:[%s4] sm:$0x1]
      %v2736 = vlaneseq
      %v2737 = vshrl.u32 %v2736, 7
      %v2738 = vsub.s32 0, %v2737
      %v2739 = vrot.slane %v2734, %v2738
      %v2741 = vadd.f32 %v2726, %v2739
      %v2742 = vadd.f32 %v2727, %v2739
      %v2743 = vadd.f32 %v2728, %v2739
      %v2744 = vadd.f32 %v2729, %v2739
      %v2745 = vadd.f32 %v2730, %v2739
      %v2746 = vadd.f32 %v2731, %v2739
      %v2747 = vadd.f32 %v2732, %v2739
      %v2748 = vadd.f32 %v2733, %v2739
      %v2749 = vmul.f32 %v2741, 0.2
      %v2750 = vmul.f32 %v2742, 0.2
      %v2751 = vmul.f32 %v2743, 0.2
      %v2752 = vmul.f32 %v2744, 0.2
      %v2753 = vmul.f32 %v2745, 0.2
      %v2754 = vmul.f32 %v2746, 0.2
      %v2755 = vmul.f32 %v2747, 0.2
      %v2756 = vmul.f32 %v2748, 0.2
      %v2757 = vmax.f32 %v2741, %v2749
      %v2758 = vmax.f32 %v2742, %v2750
      %v2759 = vmax.f32 %v2743, %v2751
      %v2760 = vmax.f32 %v2744, %v2752
      %v2761 = vmax.f32 %v2745, %v2753
      %v2762 = vmax.f32 %v2746, %v2754
      %v2763 = vmax.f32 %v2747, %v2755
      %v2764 = vmax.f32 %v2748, %v2756
      %vm2772 = vcmask 1046528
      %v2773 = vrot.slane %v2757, 1
      %v2774 = vrot.slane %v2758, 1
      %v2775 = vsel %vm2772, %v2773, %v2774
      %v2776 = vrot.slane %v2759, 1
      %v2777 = vsel %vm2772, %v2774, %v2776
      %v2778 = vrot.slane %v2760, 1
      %v2779 = vsel %vm2772, %v2776, %v2778
      %v2780 = vrot.slane %v2761, 1
      %v2781 = vsel %vm2772, %v2778, %v2780
      %v2782 = vrot.slane %v2762, 1
      %v2783 = vsel %vm2772, %v2780, %v2782
      %v2784 = vrot.slane %v2763, 1
      %v2785 = vsel %vm2772, %v2782, %v2784
      %v2793 = vmax.f32 %v2757, %v2775
      %v2794 = vmax.f32 %v2758, %v2777
      %v2795 = vmax.f32 %v2759, %v2779
      %v2796 = vmax.f32 %v2760, %v2781
      %v2797 = vmax.f32 %v2761, %v2783
      %v2798 = vmax.f32 %v2762, %v2785
      %v2799 = vmax.f32 %v2763, %v2784
      %v2801 = vrot.slane %v2764, 1
      %v2802 = vsel %vm2772, %v2784, %v2801
      %v2805 = vmax.f32 %v2763, %v2802
      %v2806 = vmax.f32 %v2764, %v2801
      %v2807 = vmax.f32 %v2793, %v2794
      %v2808 = vmax.f32 %v2794, %v2795
      %v2809 = vmax.f32 %v2795, %v2796
      %v2810 = vmax.f32 %v2796, %v2797
      %v2811 = vmax.f32 %v2797, %v2798
      %v2812 = vmax.f32 %v2798, %v2805
      %v2813 = vmax.f32 %v2799, %v2806
      %2821 = vrot.lane.b32.xlu0 %v2807, 120
      %v2822 = vpop.permute.xlu0 %2821
      %2823 = vrot.lane.b32.xlu0 %v2808, 120
      %v2824 = vpop.permute.xlu0 %2823
      %2825 = vrot.lane.b32.xlu0 %v2809, 120
      %v2826 = vpop.permute.xlu0 %2825
      %2827 = vrot.lane.b32.xlu0 %v2810, 120
      %v2828 = vpop.permute.xlu0 %2827
      %2829 = vrot.lane.b32.xlu0 %v2811, 120
      %v2830 = vpop.permute.xlu0 %2829
      %2831 = vrot.lane.b32.xlu0 %v2812, 120
      %v2832 = vpop.permute.xlu0 %2831
      %2833 = vrot.lane.b32.xlu0 %v2813, 120
      %v2834 = vpop.permute.xlu0 %2833
      %v2842 = vmax.f32 %v2807, %v2822
      %v2843 = vmax.f32 %v2808, %v2824
      %v2844 = vmax.f32 %v2809, %v2826
      %v2845 = vmax.f32 %v2810, %v2828
      %v2846 = vmax.f32 %v2811, %v2830
      %v2847 = vmax.f32 %v2812, %v2832
      %v2848 = vmax.f32 %v2813, %v2834
      %vm2849 = vcmask 457728
      %2850 = vst.msk [vmem:[%s251] sm:$0xff] %vm2849, %v2842
      %2851 = vst.msk [vmem:[%s251 + $0x8] sm:$0xff] %vm2849, %v2843
      %2852 = vst.msk [vmem:[%s251 + $0x10] sm:$0xff] %vm2849, %v2844
      %2853 = vst.msk [vmem:[%s251 + $0x18] sm:$0xff] %vm2849, %v2845
      %2854 = vst.msk [vmem:[%s251 + $0x20] sm:$0xff] %vm2849, %v2846
      %2855 = vst.msk [vmem:[%s251 + $0x28] sm:$0xff] %vm2849, %v2847
      %vm2856 = vcmask 456704
      %2857 = vst.msk [vmem:[%s251 + $0x30] sm:$0x7f] %vm2856, %v2848
      %p2858 = scmp.lt.s32.totalorder %s17, 1
      %s2859 = scalar_select %p2858, %s17, 1
      %s2860 = smul.addr %s2859, 7
      %s2861 = smul.addr %s2860, 8
      %s2862 = scalar_lea.vmem %s6, %s2861
      // Predicated region
      $region45: #{encoder_block_forward.1} parent=43 // pred_check
        %p2863 = pneg %p166
      $region46: #{encoder_block_forward.1} parent=43 // pred_check_branch
        %2865 = sbr.rel (%p2863) target = $region48
      $region47: #{encoder_block_forward.1} parent=43 // pred_region
        _
      $region48: #{encoder_block_forward.1} parent=43 // pred_fallthru
        _
    $region44: #{encoder_block_forward.1} parent=5 // pred_fallthru
      _
    %p2866 = scmp.le.s32.totalorder 2, %s12
    // Predicated region
    $region49: #{encoder_block_forward.1} parent=5 // pred_check
      %p2867 = pneg %p2866
    $region50: #{encoder_block_forward.1} parent=5 // pred_check_branch
      %2869 = sbr.rel (%p2867) target = $region52
    $region51: #{encoder_block_forward.1} parent=5 // pred_region
      %s2870 = ssub.s32 %s12, 2
      // Predicated region
      $region53: #{encoder_block_forward.1} parent=51 // pred_check
        %p2871 = pneg %p172
      $region54: #{encoder_block_forward.1} parent=51 // pred_check_branch
        %2873 = sbr.rel (%p2871) target = $region56
      $region55: #{encoder_block_forward.1} parent=51 // pred_region
        %p2874 = scmp.lt.s32.totalorder %s18, 1
        %s2875 = scalar_select %p2874, %s18, 1
        %s2876 = smul.addr %s2875, 7
        %s2877 = smul.addr %s2876, 8
        %s2878 = scalar_lea.vmem %s6, %s2877
      $region56: #{encoder_block_forward.1} parent=51 // pred_fallthru
        _
    $region52: #{encoder_block_forward.1} parent=5 // pred_fallthru
      _
  $region6: #{encoder_block_forward.1} parent=0 // loop_footer
    %s16 = sadd.s32 1, %s12
  $region7: #{encoder_block_forward.1} parent=0 // loop_footer_branch
    %11 = sbr.rel target = $region3
  $region8: #{encoder_block_forward.1} parent=0 // loop_exit
    _

</llo_original>
